<compile_context>
chip_gen: v7x
topology: tpu7x:2x2x1
jax: 0.10.0
libtpu: 0.0.40
codegen_flags: <defaults>
</compile_context>

<pallas_src>
import functools

import jax
import jax.numpy as jnp
from jax.experimental import pallas as pl
from jax.experimental.pallas import tpu as pltpu

FEAT_DIM = 32        # network_config['feat_dim'] (small synthetic value)
NUM_CLASSES = 10     # network_config['num_classes']
C_IN = 3             # modality = 'rgb'
KT = KH = KW = 3
FC_STD = 0.01        # network_config['decoder_fc_std']

LANE = 128
K_SPATIAL = KH * KW * C_IN                 # 27 contracted taps per temporal offset
K_PAD = 32                                 # pad 27 -> 32 only (NOT 128: HBM/DMA-bound)
COUT_PAD = ((FEAT_DIM + LANE - 1) // LANE) * LANE      # 128 (lane-dense conv output)
CLS_PAD = ((NUM_CLASSES + LANE - 1) // LANE) * LANE    # 128 (lane-dense logits)
TILE_M = 128                               # in-kernel M strip (bounded vreg pressure)


# ---------------------------------------------------------------- Pallas kernel

def _stem_pool_fc_kernel(g_ref, wc_ref, bc_ref, wf_ref, bf_ref, o_ref, *, To, HW, tile_m):
    """Fused Conv3d stem + ReLU + global-avg-pool + FC for one sample (one grid step).

    g_ref  : (1, (To+2)*HW, K_PAD)    bf16  spatial-tap space-to-depth of the clip,
                                            rows flattened as (padded_time, h, w)
    wc_ref : (KT, K_PAD, COUT_PAD)    bf16  conv weights, one slab per temporal tap
    bc_ref : (1, COUT_PAD) f32
    wf_ref : (COUT_PAD, CLS_PAD) f32        FC weight, pre-scaled by 1/(To*HW)
    bf_ref : (1, CLS_PAD) f32
    o_ref  : (1, 1, CLS_PAD) f32 logits
    """
    M = To * HW
    bias = bc_ref[...]                                   # hoisted broadcast source
    pooled = jnp.zeros((1, COUT_PAD), jnp.float32)

    # Strip-mine M; all slice starts/sizes are static (Python ints), so this unrolls.
    for m0 in range(0, M, tile_m):
        mt = min(tile_m, M - m0)
        # acc initialized by the first temporal tap's matmul (no zero-fill + add).
        acc = jnp.dot(g_ref[0, m0:m0 + mt, :], wc_ref[0],
                      preferred_element_type=jnp.float32)
        for dt in range(1, KT):                          # remaining temporal taps
            acc += jnp.dot(g_ref[0, dt * HW + m0: dt * HW + m0 + mt, :], wc_ref[dt],
                           preferred_element_type=jnp.float32)
        acc = jnp.maximum(acc + bias, 0.0)               # bias + ReLU in f32
        pooled = pooled + jnp.sum(acc, axis=0, keepdims=True)

    # Global average pool's 1/(To*HW) is folded into wf_ref (sum-pool + scaled FC).
    # TODO(synk): dropout (p=0.5) is eval-mode identity here.
    logits = jnp.dot(pooled, wf_ref[...], preferred_element_type=jnp.float32) + bf_ref[...]
    o_ref[0] = logits                                    # lane-dense (1, CLS_PAD) row


# ---------------------------------------------------------------- JAX glue

def _spatial_tap_space_to_depth(x):
    """(N, C, T, H, W) -> (N, (T+2)*H'*W', K_PAD) bf16.

    Gathers the kH*kW stride-2 spatial taps once in XLA so the kernel only handles the
    temporal taps as dense matmuls.  The channels-last transpose is done on the small
    un-expanded input and the taps are stacked on a *trailing* axis, so no full-size
    post-stack transpose is materialized.  Column index k = (dh*KW + dw)*C_IN + c,
    matching the packed conv weight.
    """
    N, C, T, H, W = x.shape
    Ho, Wo = H // 2, W // 2
    xp = jnp.transpose(x, (0, 2, 3, 4, 1)).astype(jnp.bfloat16)   # (N, T, H, W, C)
    xp = jnp.pad(xp, ((0, 0), (1, 1), (1, 1), (1, 1), (0, 0)))    # conv pad=1 everywhere
    taps = [xp[:, :, dh:dh + 2 * Ho - 1:2, dw:dw + 2 * Wo - 1:2, :]
            for dh in range(KH) for dw in range(KW)]
    g = jnp.stack(taps, axis=-2)                          # (N, T+2, Ho, Wo, 9, C)
    g = g.reshape(N, (T + 2) * Ho * Wo, K_SPATIAL)
    g = jnp.pad(g, ((0, 0), (0, 0), (0, K_PAD - K_SPATIAL)))
    return g, (T, Ho, Wo)


def forward_single(clips, params):
    """EncoderDecoder.forward_single: encoder stem + 'avgfc' decoder, one fused kernel."""
    g, (To, Ho, Wo) = _spatial_tap_space_to_depth(clips)
    N = clips.shape[0]
    Tp = To + KT - 1
    HW = Ho * Wo
    tile_m = min(TILE_M, To * HW)

    kernel = functools.partial(_stem_pool_fc_kernel, To=To, HW=HW, tile_m=tile_m)
    out = pl.pallas_call(
        kernel,
        out_shape=jax.ShapeDtypeStruct((N, 1, CLS_PAD), jnp.float32),
        grid=(N,),
        in_specs=[
            # whole (temporally padded) sample slab, DMA'd once per sample
            pl.BlockSpec((1, Tp * HW, K_PAD), lambda n: (n, 0, 0)),
            pl.BlockSpec((KT, K_PAD, COUT_PAD), lambda n: (0, 0, 0)),
            pl.BlockSpec((1, COUT_PAD), lambda n: (0, 0)),
            pl.BlockSpec((COUT_PAD, CLS_PAD), lambda n: (0, 0)),
            pl.BlockSpec((1, CLS_PAD), lambda n: (0, 0)),
        ],
        out_specs=pl.BlockSpec((1, 1, CLS_PAD), lambda n: (n, 0, 0)),
        compiler_params=pltpu.CompilerParams(
            dimension_semantics=("parallel",),            # megacore across samples
            vmem_limit_bytes=32 * 1024 * 1024),
    )(g, params["w_conv"], params["b_conv"], params["w_fc"], params["b_fc"])

    logits = out[:, 0, :NUM_CLASSES]
    # 'avgfc' has no attention maps; keep the 3-tuple contract used by forward_multi.
    return (logits, None, None)


@jax.jit
def encoder_decoder_forward(clips, params):
    """Mirrors EncoderDecoder.forward (eval mode, no targets)."""
    if clips.ndim == 5:
        return forward_single(clips, params)
    elif clips.ndim == 6:
        B, NC = clips.shape[:2]
        outputs = forward_single(clips.reshape((B * NC,) + clips.shape[2:]), params)
        clip_scores = jax.nn.softmax(outputs[0], axis=1)
        clip_scores = clip_scores.reshape(B, NC, -1).mean(axis=1)
        return (clip_scores, outputs[1], outputs[2])
    else:
        raise TypeError("Input size mis-match!")


# ---------------------------------------------------------------- params & reference

def init_torch_params(key):
    """Parameters in PyTorch layouts: Conv3d (O,I,kT,kH,kW), Linear (out,in)."""
    k1, k2 = jax.random.split(key)
    w_conv = jax.random.normal(k1, (FEAT_DIM, C_IN, KT, KH, KW), jnp.float32) * 0.05
    b_conv = jnp.zeros((FEAT_DIM,), jnp.float32)
    w_fc = jax.random.normal(k2, (NUM_CLASSES, FEAT_DIM), jnp.float32) * FC_STD
    b_fc = jnp.zeros((NUM_CLASSES,), jnp.float32)
    return {"w_conv": w_conv, "b_conv": b_conv, "w_fc": w_fc, "b_fc": b_fc}


def pack_params(tp, clip_thw):
    """PyTorch-layout weights -> lane-dense kernel operands.

    `clip_thw = (T, H, W)` of the clips this model will see: the global-average-pool
    scale 1/(T * H/2 * W/2) is folded into the FC weight, so the kernel sum-pools.
    """
    T, H, W = clip_thw
    inv_s = 1.0 / float(T * (H // 2) * (W // 2))
    w = jnp.transpose(tp["w_conv"], (2, 3, 4, 1, 0))       # (kT, kH, kW, Cin, Cout)
    w = w.reshape(KT, K_SPATIAL, FEAT_DIM)                 # k = (dh*KW+dw)*C_IN + c
    w = jnp.pad(w, ((0, 0), (0, K_PAD - K_SPATIAL), (0, COUT_PAD - FEAT_DIM)))
    b_conv = jnp.pad(tp["b_conv"], (0, COUT_PAD - FEAT_DIM)).reshape(1, COUT_PAD)
    w_fc = jnp.zeros((COUT_PAD, CLS_PAD), jnp.float32)
    w_fc = w_fc.at[:FEAT_DIM, :NUM_CLASSES].set(tp["w_fc"].T * inv_s)
    b_fc = jnp.pad(tp["b_fc"], (0, CLS_PAD - NUM_CLASSES)).reshape(1, CLS_PAD)
    return {"w_conv": w.astype(jnp.bfloat16), "b_conv": b_conv,
            "w_fc": w_fc, "b_fc": b_fc}


def reference_forward_single(clips, tp):
    """Pure-JAX (f32) reference: Conv3d + ReLU + global avg pool + FC."""
    out = jax.lax.conv_general_dilated(
        clips.astype(jnp.float32), tp["w_conv"],
        window_strides=(1, 2, 2),
        padding=((1, 1), (1, 1), (1, 1)),
        dimension_numbers=("NCDHW", "OIDHW", "NCDHW"))
    out = jnp.maximum(out + tp["b_conv"].reshape(1, -1, 1, 1, 1), 0.0)
    pooled = out.mean(axis=(2, 3, 4))
    return pooled @ tp["w_fc"].T + tp["b_fc"]


if __name__ == "__main__":
    key = jax.random.PRNGKey(0)
    kp, kx, ky = jax.random.split(key, 3)
    torch_params = init_torch_params(kp)
    params = pack_params(torch_params, clip_thw=(8, 16, 16))

    # single-sample path: clips.dim() == 5 -> (N, C, T, H, W)
    clips5 = jax.random.normal(kx, (2, C_IN, 8, 16, 16), jnp.float32)
    out5 = encoder_decoder_forward(clips5, params)
    jax.block_until_ready(out5[0])
    assert out5[0].shape == (2, NUM_CLASSES)

    # numeric sanity vs pure-JAX f32 reference (kernel uses bf16 inputs, f32 accum)
    ref5 = reference_forward_single(clips5, torch_params)
    assert jnp.allclose(out5[0], ref5, rtol=5e-2, atol=2e-3), \
        float(jnp.max(jnp.abs(out5[0] - ref5)))

    # multi-clip path: clips.dim() == 6 -> (B, num_clips, C, T, H, W)
    clips6 = jax.random.normal(ky, (2, 2, C_IN, 8, 16, 16), jnp.float32)
    out6 = encoder_decoder_forward(clips6, params)
    jax.block_until_ready(out6[0])
    assert out6[0].shape == (2, NUM_CLASSES)

    print("KERNEL_OK")
</pallas_src>

<mosaic_0001>
module attributes {stable_mosaic.version = 11 : i64} {
  func.func @_stem_pool_fc_kernel(%arg0: i32, %arg1: memref<1x640x32xbf16, #tpu.memory_space<vmem>>, %arg2: memref<3x32x128xbf16, #tpu.memory_space<vmem>>, %arg3: memref<1x128xf32, #tpu.memory_space<vmem>>, %arg4: memref<128x128xf32, #tpu.memory_space<vmem>>, %arg5: memref<1x128xf32, #tpu.memory_space<vmem>>, %arg6: memref<1x1x128xf32, #tpu.memory_space<vmem>>) attributes {dimension_semantics = [#tpu.dimension_semantics<parallel>], iteration_bounds = array<i64: 2>, scalar_prefetch = 0 : i64, scratch_operands = 0 : i64, tpu.core_type = #tpu.core_type<tc>, window_params = [{transform_indices = @transform_0, window_bounds = array<i64: 1, 640, 32>}, {pipeline_mode = #tpu.pipeline_mode<synchronous>, transform_indices = @transform_1, window_bounds = array<i64: 3, 32, 128>}, {pipeline_mode = #tpu.pipeline_mode<synchronous>, transform_indices = @transform_2, window_bounds = array<i64: 1, 128>}, {pipeline_mode = #tpu.pipeline_mode<synchronous>, transform_indices = @transform_3, window_bounds = array<i64: 128, 128>}, {pipeline_mode = #tpu.pipeline_mode<synchronous>, transform_indices = @transform_4, window_bounds = array<i64: 1, 128>}, {transform_indices = @transform_5, window_bounds = array<i64: 1, 1, 128>}]} {
    %c0 = arith.constant 0 : index
    %c0_0 = arith.constant 0 : index
    %0 = vector.load %arg3[%c0, %c0_0] : memref<1x128xf32, #tpu.memory_space<vmem>>, vector<1x128xf32>
    %cst = arith.constant 0.000000e+00 : f32
    %1 = vector.broadcast %cst : f32 to vector<1x128xf32>
    %c0_1 = arith.constant 0 : index
    %c0_2 = arith.constant 0 : index
    %c0_3 = arith.constant 0 : index
    %2 = vector.load %arg1[%c0_1, %c0_2, %c0_3] : memref<1x640x32xbf16, #tpu.memory_space<vmem>>, vector<1x128x32xbf16>
    %3 = vector.shape_cast %2 : vector<1x128x32xbf16> to vector<128x32xbf16>
    %c0_4 = arith.constant 0 : index
    %c0_5 = arith.constant 0 : index
    %c0_6 = arith.constant 0 : index
    %4 = vector.load %arg2[%c0_4, %c0_5, %c0_6] : memref<3x32x128xbf16, #tpu.memory_space<vmem>>, vector<1x32x128xbf16>
    %5 = vector.shape_cast %4 : vector<1x32x128xbf16> to vector<32x128xbf16>
    %cst_7 = arith.constant dense<0.000000e+00> : vector<128x128xf32>
    %6 = tpu.matmul %3, %5, %cst_7 {dimension_numbers = #tpu.dot_dimension_numbers<[1], [0], [0], [1], [0, 0, 1, 1], [], []>} : vector<128x32xbf16>, vector<32x128xbf16>, vector<128x128xf32> -> vector<128x128xf32>
    %c0_8 = arith.constant 0 : index
    %c64 = arith.constant 64 : index
    %c0_9 = arith.constant 0 : index
    %7 = vector.load %arg1[%c0_8, %c64, %c0_9] : memref<1x640x32xbf16, #tpu.memory_space<vmem>>, vector<1x128x32xbf16>
    %8 = vector.shape_cast %7 : vector<1x128x32xbf16> to vector<128x32xbf16>
    %c1 = arith.constant 1 : index
    %c0_10 = arith.constant 0 : index
    %c0_11 = arith.constant 0 : index
    %9 = vector.load %arg2[%c1, %c0_10, %c0_11] : memref<3x32x128xbf16, #tpu.memory_space<vmem>>, vector<1x32x128xbf16>
    %10 = vector.shape_cast %9 : vector<1x32x128xbf16> to vector<32x128xbf16>
    %cst_12 = arith.constant dense<0.000000e+00> : vector<128x128xf32>
    %11 = tpu.matmul %8, %10, %cst_12 {dimension_numbers = #tpu.dot_dimension_numbers<[1], [0], [0], [1], [0, 0, 1, 1], [], []>} : vector<128x32xbf16>, vector<32x128xbf16>, vector<128x128xf32> -> vector<128x128xf32>
    %12 = arith.addf %6, %11 : vector<128x128xf32>
    %c0_13 = arith.constant 0 : index
    %c128 = arith.constant 128 : index
    %c0_14 = arith.constant 0 : index
    %13 = vector.load %arg1[%c0_13, %c128, %c0_14] : memref<1x640x32xbf16, #tpu.memory_space<vmem>>, vector<1x128x32xbf16>
    %14 = vector.shape_cast %13 : vector<1x128x32xbf16> to vector<128x32xbf16>
    %c2 = arith.constant 2 : index
    %c0_15 = arith.constant 0 : index
    %c0_16 = arith.constant 0 : index
    %15 = vector.load %arg2[%c2, %c0_15, %c0_16] : memref<3x32x128xbf16, #tpu.memory_space<vmem>>, vector<1x32x128xbf16>
    %16 = vector.shape_cast %15 : vector<1x32x128xbf16> to vector<32x128xbf16>
    %cst_17 = arith.constant dense<0.000000e+00> : vector<128x128xf32>
    %17 = tpu.matmul %14, %16, %cst_17 {dimension_numbers = #tpu.dot_dimension_numbers<[1], [0], [0], [1], [0, 0, 1, 1], [], []>} : vector<128x32xbf16>, vector<32x128xbf16>, vector<128x128xf32> -> vector<128x128xf32>
    %18 = arith.addf %12, %17 : vector<128x128xf32>
    %19 = vector.broadcast %0 : vector<1x128xf32> to vector<128x128xf32>
    %20 = arith.addf %18, %19 : vector<128x128xf32>
    %cst_18 = arith.constant 0.000000e+00 : f32
    %21 = vector.broadcast %cst_18 : f32 to vector<128x128xf32>
    %22 = arith.maximumf %20, %21 : vector<128x128xf32>
    %cst_19 = arith.constant dense<0.000000e+00> : vector<128xf32>
    %23 = vector.multi_reduction <add>, %22, %cst_19 [0] : vector<128x128xf32> to vector<128xf32>
    %24 = vector.shape_cast %23 : vector<128xf32> to vector<1x128xf32>
    %25 = arith.addf %1, %24 : vector<1x128xf32>
    %c0_20 = arith.constant 0 : index
    %c128_21 = arith.constant 128 : index
    %c0_22 = arith.constant 0 : index
    %26 = vector.load %arg1[%c0_20, %c128_21, %c0_22] : memref<1x640x32xbf16, #tpu.memory_space<vmem>>, vector<1x128x32xbf16>
    %27 = vector.shape_cast %26 : vector<1x128x32xbf16> to vector<128x32xbf16>
    %c0_23 = arith.constant 0 : index
    %c0_24 = arith.constant 0 : index
    %c0_25 = arith.constant 0 : index
    %28 = vector.load %arg2[%c0_23, %c0_24, %c0_25] : memref<3x32x128xbf16, #tpu.memory_space<vmem>>, vector<1x32x128xbf16>
    %29 = vector.shape_cast %28 : vector<1x32x128xbf16> to vector<32x128xbf16>
    %cst_26 = arith.constant dense<0.000000e+00> : vector<128x128xf32>
    %30 = tpu.matmul %27, %29, %cst_26 {dimension_numbers = #tpu.dot_dimension_numbers<[1], [0], [0], [1], [0, 0, 1, 1], [], []>} : vector<128x32xbf16>, vector<32x128xbf16>, vector<128x128xf32> -> vector<128x128xf32>
    %c0_27 = arith.constant 0 : index
    %c192 = arith.constant 192 : index
    %c0_28 = arith.constant 0 : index
    %31 = vector.load %arg1[%c0_27, %c192, %c0_28] : memref<1x640x32xbf16, #tpu.memory_space<vmem>>, vector<1x128x32xbf16>
    %32 = vector.shape_cast %31 : vector<1x128x32xbf16> to vector<128x32xbf16>
    %c1_29 = arith.constant 1 : index
    %c0_30 = arith.constant 0 : index
    %c0_31 = arith.constant 0 : index
    %33 = vector.load %arg2[%c1_29, %c0_30, %c0_31] : memref<3x32x128xbf16, #tpu.memory_space<vmem>>, vector<1x32x128xbf16>
    %34 = vector.shape_cast %33 : vector<1x32x128xbf16> to vector<32x128xbf16>
    %cst_32 = arith.constant dense<0.000000e+00> : vector<128x128xf32>
    %35 = tpu.matmul %32, %34, %cst_32 {dimension_numbers = #tpu.dot_dimension_numbers<[1], [0], [0], [1], [0, 0, 1, 1], [], []>} : vector<128x32xbf16>, vector<32x128xbf16>, vector<128x128xf32> -> vector<128x128xf32>
    %36 = arith.addf %30, %35 : vector<128x128xf32>
    %c0_33 = arith.constant 0 : index
    %c256 = arith.constant 256 : index
    %c0_34 = arith.constant 0 : index
    %37 = vector.load %arg1[%c0_33, %c256, %c0_34] : memref<1x640x32xbf16, #tpu.memory_space<vmem>>, vector<1x128x32xbf16>
    %38 = vector.shape_cast %37 : vector<1x128x32xbf16> to vector<128x32xbf16>
    %c2_35 = arith.constant 2 : index
    %c0_36 = arith.constant 0 : index
    %c0_37 = arith.constant 0 : index
    %39 = vector.load %arg2[%c2_35, %c0_36, %c0_37] : memref<3x32x128xbf16, #tpu.memory_space<vmem>>, vector<1x32x128xbf16>
    %40 = vector.shape_cast %39 : vector<1x32x128xbf16> to vector<32x128xbf16>
    %cst_38 = arith.constant dense<0.000000e+00> : vector<128x128xf32>
    %41 = tpu.matmul %38, %40, %cst_38 {dimension_numbers = #tpu.dot_dimension_numbers<[1], [0], [0], [1], [0, 0, 1, 1], [], []>} : vector<128x32xbf16>, vector<32x128xbf16>, vector<128x128xf32> -> vector<128x128xf32>
    %42 = arith.addf %36, %41 : vector<128x128xf32>
    %43 = vector.broadcast %0 : vector<1x128xf32> to vector<128x128xf32>
    %44 = arith.addf %42, %43 : vector<128x128xf32>
    %cst_39 = arith.constant 0.000000e+00 : f32
    %45 = vector.broadcast %cst_39 : f32 to vector<128x128xf32>
    %46 = arith.maximumf %44, %45 : vector<128x128xf32>
    %cst_40 = arith.constant dense<0.000000e+00> : vector<128xf32>
    %47 = vector.multi_reduction <add>, %46, %cst_40 [0] : vector<128x128xf32> to vector<128xf32>
    %48 = vector.shape_cast %47 : vector<128xf32> to vector<1x128xf32>
    %49 = arith.addf %25, %48 : vector<1x128xf32>
    %c0_41 = arith.constant 0 : index
    %c256_42 = arith.constant 256 : index
    %c0_43 = arith.constant 0 : index
    %50 = vector.load %arg1[%c0_41, %c256_42, %c0_43] : memref<1x640x32xbf16, #tpu.memory_space<vmem>>, vector<1x128x32xbf16>
    %51 = vector.shape_cast %50 : vector<1x128x32xbf16> to vector<128x32xbf16>
    %c0_44 = arith.constant 0 : index
    %c0_45 = arith.constant 0 : index
    %c0_46 = arith.constant 0 : index
    %52 = vector.load %arg2[%c0_44, %c0_45, %c0_46] : memref<3x32x128xbf16, #tpu.memory_space<vmem>>, vector<1x32x128xbf16>
    %53 = vector.shape_cast %52 : vector<1x32x128xbf16> to vector<32x128xbf16>
    %cst_47 = arith.constant dense<0.000000e+00> : vector<128x128xf32>
    %54 = tpu.matmul %51, %53, %cst_47 {dimension_numbers = #tpu.dot_dimension_numbers<[1], [0], [0], [1], [0, 0, 1, 1], [], []>} : vector<128x32xbf16>, vector<32x128xbf16>, vector<128x128xf32> -> vector<128x128xf32>
    %c0_48 = arith.constant 0 : index
    %c320 = arith.constant 320 : index
    %c0_49 = arith.constant 0 : index
    %55 = vector.load %arg1[%c0_48, %c320, %c0_49] : memref<1x640x32xbf16, #tpu.memory_space<vmem>>, vector<1x128x32xbf16>
    %56 = vector.shape_cast %55 : vector<1x128x32xbf16> to vector<128x32xbf16>
    %c1_50 = arith.constant 1 : index
    %c0_51 = arith.constant 0 : index
    %c0_52 = arith.constant 0 : index
    %57 = vector.load %arg2[%c1_50, %c0_51, %c0_52] : memref<3x32x128xbf16, #tpu.memory_space<vmem>>, vector<1x32x128xbf16>
    %58 = vector.shape_cast %57 : vector<1x32x128xbf16> to vector<32x128xbf16>
    %cst_53 = arith.constant dense<0.000000e+00> : vector<128x128xf32>
    %59 = tpu.matmul %56, %58, %cst_53 {dimension_numbers = #tpu.dot_dimension_numbers<[1], [0], [0], [1], [0, 0, 1, 1], [], []>} : vector<128x32xbf16>, vector<32x128xbf16>, vector<128x128xf32> -> vector<128x128xf32>
    %60 = arith.addf %54, %59 : vector<128x128xf32>
    %c0_54 = arith.constant 0 : index
    %c384 = arith.constant 384 : index
    %c0_55 = arith.constant 0 : index
    %61 = vector.load %arg1[%c0_54, %c384, %c0_55] : memref<1x640x32xbf16, #tpu.memory_space<vmem>>, vector<1x128x32xbf16>
    %62 = vector.shape_cast %61 : vector<1x128x32xbf16> to vector<128x32xbf16>
    %c2_56 = arith.constant 2 : index
    %c0_57 = arith.constant 0 : index
    %c0_58 = arith.constant 0 : index
    %63 = vector.load %arg2[%c2_56, %c0_57, %c0_58] : memref<3x32x128xbf16, #tpu.memory_space<vmem>>, vector<1x32x128xbf16>
    %64 = vector.shape_cast %63 : vector<1x32x128xbf16> to vector<32x128xbf16>
    %cst_59 = arith.constant dense<0.000000e+00> : vector<128x128xf32>
    %65 = tpu.matmul %62, %64, %cst_59 {dimension_numbers = #tpu.dot_dimension_numbers<[1], [0], [0], [1], [0, 0, 1, 1], [], []>} : vector<128x32xbf16>, vector<32x128xbf16>, vector<128x128xf32> -> vector<128x128xf32>
    %66 = arith.addf %60, %65 : vector<128x128xf32>
    %67 = vector.broadcast %0 : vector<1x128xf32> to vector<128x128xf32>
    %68 = arith.addf %66, %67 : vector<128x128xf32>
    %cst_60 = arith.constant 0.000000e+00 : f32
    %69 = vector.broadcast %cst_60 : f32 to vector<128x128xf32>
    %70 = arith.maximumf %68, %69 : vector<128x128xf32>
    %cst_61 = arith.constant dense<0.000000e+00> : vector<128xf32>
    %71 = vector.multi_reduction <add>, %70, %cst_61 [0] : vector<128x128xf32> to vector<128xf32>
    %72 = vector.shape_cast %71 : vector<128xf32> to vector<1x128xf32>
    %73 = arith.addf %49, %72 : vector<1x128xf32>
    %c0_62 = arith.constant 0 : index
    %c384_63 = arith.constant 384 : index
    %c0_64 = arith.constant 0 : index
    %74 = vector.load %arg1[%c0_62, %c384_63, %c0_64] : memref<1x640x32xbf16, #tpu.memory_space<vmem>>, vector<1x128x32xbf16>
    %75 = vector.shape_cast %74 : vector<1x128x32xbf16> to vector<128x32xbf16>
    %c0_65 = arith.constant 0 : index
    %c0_66 = arith.constant 0 : index
    %c0_67 = arith.constant 0 : index
    %76 = vector.load %arg2[%c0_65, %c0_66, %c0_67] : memref<3x32x128xbf16, #tpu.memory_space<vmem>>, vector<1x32x128xbf16>
    %77 = vector.shape_cast %76 : vector<1x32x128xbf16> to vector<32x128xbf16>
    %cst_68 = arith.constant dense<0.000000e+00> : vector<128x128xf32>
    %78 = tpu.matmul %75, %77, %cst_68 {dimension_numbers = #tpu.dot_dimension_numbers<[1], [0], [0], [1], [0, 0, 1, 1], [], []>} : vector<128x32xbf16>, vector<32x128xbf16>, vector<128x128xf32> -> vector<128x128xf32>
    %c0_69 = arith.constant 0 : index
    %c448 = arith.constant 448 : index
    %c0_70 = arith.constant 0 : index
    %79 = vector.load %arg1[%c0_69, %c448, %c0_70] : memref<1x640x32xbf16, #tpu.memory_space<vmem>>, vector<1x128x32xbf16>
    %80 = vector.shape_cast %79 : vector<1x128x32xbf16> to vector<128x32xbf16>
    %c1_71 = arith.constant 1 : index
    %c0_72 = arith.constant 0 : index
    %c0_73 = arith.constant 0 : index
    %81 = vector.load %arg2[%c1_71, %c0_72, %c0_73] : memref<3x32x128xbf16, #tpu.memory_space<vmem>>, vector<1x32x128xbf16>
    %82 = vector.shape_cast %81 : vector<1x32x128xbf16> to vector<32x128xbf16>
    %cst_74 = arith.constant dense<0.000000e+00> : vector<128x128xf32>
    %83 = tpu.matmul %80, %82, %cst_74 {dimension_numbers = #tpu.dot_dimension_numbers<[1], [0], [0], [1], [0, 0, 1, 1], [], []>} : vector<128x32xbf16>, vector<32x128xbf16>, vector<128x128xf32> -> vector<128x128xf32>
    %84 = arith.addf %78, %83 : vector<128x128xf32>
    %c0_75 = arith.constant 0 : index
    %c512 = arith.constant 512 : index
    %c0_76 = arith.constant 0 : index
    %85 = vector.load %arg1[%c0_75, %c512, %c0_76] : memref<1x640x32xbf16, #tpu.memory_space<vmem>>, vector<1x128x32xbf16>
    %86 = vector.shape_cast %85 : vector<1x128x32xbf16> to vector<128x32xbf16>
    %c2_77 = arith.constant 2 : index
    %c0_78 = arith.constant 0 : index
    %c0_79 = arith.constant 0 : index
    %87 = vector.load %arg2[%c2_77, %c0_78, %c0_79] : memref<3x32x128xbf16, #tpu.memory_space<vmem>>, vector<1x32x128xbf16>
    %88 = vector.shape_cast %87 : vector<1x32x128xbf16> to vector<32x128xbf16>
    %cst_80 = arith.constant dense<0.000000e+00> : vector<128x128xf32>
    %89 = tpu.matmul %86, %88, %cst_80 {dimension_numbers = #tpu.dot_dimension_numbers<[1], [0], [0], [1], [0, 0, 1, 1], [], []>} : vector<128x32xbf16>, vector<32x128xbf16>, vector<128x128xf32> -> vector<128x128xf32>
    %90 = arith.addf %84, %89 : vector<128x128xf32>
    %91 = vector.broadcast %0 : vector<1x128xf32> to vector<128x128xf32>
    %92 = arith.addf %90, %91 : vector<128x128xf32>
    %cst_81 = arith.constant 0.000000e+00 : f32
    %93 = vector.broadcast %cst_81 : f32 to vector<128x128xf32>
    %94 = arith.maximumf %92, %93 : vector<128x128xf32>
    %cst_82 = arith.constant dense<0.000000e+00> : vector<128xf32>
    %95 = vector.multi_reduction <add>, %94, %cst_82 [0] : vector<128x128xf32> to vector<128xf32>
    %96 = vector.shape_cast %95 : vector<128xf32> to vector<1x128xf32>
    %97 = arith.addf %73, %96 : vector<1x128xf32>
    %c0_83 = arith.constant 0 : index
    %c0_84 = arith.constant 0 : index
    %98 = vector.load %arg4[%c0_83, %c0_84] : memref<128x128xf32, #tpu.memory_space<vmem>>, vector<128x128xf32>
    %cst_85 = arith.constant dense<0.000000e+00> : vector<1x128xf32>
    %99 = tpu.matmul %97, %98, %cst_85 {dimension_numbers = #tpu.dot_dimension_numbers<[1], [0], [0], [1], [0, 0, 1, 1], [], []>} : vector<1x128xf32>, vector<128x128xf32>, vector<1x128xf32> -> vector<1x128xf32>
    %c0_86 = arith.constant 0 : index
    %c0_87 = arith.constant 0 : index
    %100 = vector.load %arg5[%c0_86, %c0_87] : memref<1x128xf32, #tpu.memory_space<vmem>>, vector<1x128xf32>
    %101 = arith.addf %99, %100 : vector<1x128xf32>
    %c0_88 = arith.constant 0 : index
    %c0_89 = arith.constant 0 : index
    %c0_90 = arith.constant 0 : index
    %102 = vector.load %arg6[%c0_88, %c0_89, %c0_90] : memref<1x1x128xf32, #tpu.memory_space<vmem>>, vector<1x1x128xf32>
    %103 = vector.shape_cast %102 : vector<1x1x128xf32> to vector<1x128xf32>
    %104 = vector.shape_cast %101 : vector<1x128xf32> to vector<1x1x128xf32>
    tpu.vector_store %arg6[%c0_88, %c0_89, %c0_90], %104 {strides = array<i32>} : memref<1x1x128xf32, #tpu.memory_space<vmem>>, vector<1x1x128xf32>,
    return
  }
  func.func @transform_0(%arg0: i32) -> (i32, i32, i32) {
    %c0_i32 = arith.constant 0 : i32
    %c0_i32_0 = arith.constant 0 : i32
    %c0_i32_1 = arith.constant 0 : i32
    return %arg0, %c0_i32, %c0_i32_0 : i32, i32, i32
  }
  func.func @transform_1(%arg0: i32) -> (i32, i32, i32) {
    %c0_i32 = arith.constant 0 : i32
    %c0_i32_0 = arith.constant 0 : i32
    %c0_i32_1 = arith.constant 0 : i32
    %c0_i32_2 = arith.constant 0 : i32
    return %c0_i32, %c0_i32_0, %c0_i32_1 : i32, i32, i32
  }
  func.func @transform_2(%arg0: i32) -> (i32, i32) {
    %c0_i32 = arith.constant 0 : i32
    %c0_i32_0 = arith.constant 0 : i32
    %c0_i32_1 = arith.constant 0 : i32
    return %c0_i32, %c0_i32_0 : i32, i32
  }
  func.func @transform_3(%arg0: i32) -> (i32, i32) {
    %c0_i32 = arith.constant 0 : i32
    %c0_i32_0 = arith.constant 0 : i32
    %c0_i32_1 = arith.constant 0 : i32
    return %c0_i32, %c0_i32_0 : i32, i32
  }
  func.func @transform_4(%arg0: i32) -> (i32, i32) {
    %c0_i32 = arith.constant 0 : i32
    %c0_i32_0 = arith.constant 0 : i32
    %c0_i32_1 = arith.constant 0 : i32
    return %c0_i32, %c0_i32_0 : i32, i32
  }
  func.func @transform_5(%arg0: i32) -> (i32, i32, i32) {
    %c0_i32 = arith.constant 0 : i32
    %c0_i32_0 = arith.constant 0 : i32
    %c0_i32_1 = arith.constant 0 : i32
    return %arg0, %c0_i32, %c0_i32_0 : i32, i32, i32
  }
}

</mosaic_0001>

<llo_original>
// kernel: encoder_decoder_forward.1
$region0: #{encoder_decoder_forward.1}
  #allocation0 [shape = 'u32[]', space=smem, size = 0x4, offset = 0x4, fixed_abs, tag = 'smem constant byte address 0x4 - core index']
  #allocation1 [shape = 'u32[144,128]{1,0:T(1,128)}', space=vmem, size = 0x12000, scoped, tag = 'internal scratch']
  %s0 = inlined_call_operand.vmem [shape: bf16[2,640,32], index: 0, kind: input, shape index: {}]
  %s1 = inlined_call_operand.vmem [shape: bf16[3,32,128], index: 1, kind: input, shape index: {}]
  %s2 = inlined_call_operand.vmem [shape: f32[1,128], index: 2, kind: input, shape index: {}]
  %s3 = inlined_call_operand.vmem [shape: f32[128,128], index: 3, kind: input, shape index: {}]
  %s4 = inlined_call_operand.vmem [shape: f32[1,128], index: 4, kind: input, shape index: {}]
  %s5 = inlined_call_operand.hbm [shape: f32[2,1,128], index: 5, kind: output, shape index: {}]
  %s6 = sld [smem:[#allocation0]]
  $region53: #{encoder_decoder_forward.1} parent=0
    _
  %s8 = ssub.s32 1, %s6
  %s9 = scalar_select 0, %s8, %s6
  $region1: #{encoder_decoder_forward.1} parent=0
    #allocation2 [shape = 'u8[1024]{0}', space=vmem, size = 0x400, scoped, tag = 'output window, operand 0']
    #allocation3 [shape = 's32[2]{0}', space=sflag, size = 0x8, scoped, tag = 'scoped memory for encoder_decoder_forward.1']
    %10 = vsyncpa [#allocation3], 0
    %s11 = scalar_lea.sflag [#allocation3], 1
    %12 = vsyncpa %s11, 0
    loop: start=0, step=1, limit=4
    $region2: #{encoder_decoder_forward.1} parent=1 // loop_pre_header
      _
    $region3: #{encoder_decoder_forward.1} parent=1 // loop_header
      %s14 = sphi 0, %s18
      %p15 = scmp.ge.s32.totalorder %s14, 4
      %s24 = sphi 0, %s26
      %s27 = sphi 0, %s24
      %s28 = sphi 0, %s27
      %s44 = sphi 0, %s28
      %s48 = sphi 0, %s48
      %s50 = sphi 0, %s48
      %s51 = sphi 0, %s50
      %s65 = sphi 0, %s51
      %s69 = sphi 0, %s69
      %s71 = sphi 0, %s69
      %s72 = sphi 0, %s71
      %s86 = sphi 0, %s72
      %s90 = sphi 0, %s90
      %s92 = sphi 0, %s90
      %s93 = sphi 0, %s92
      %s107 = sphi 0, %s93
      %s111 = sphi 0, %s111
      %s113 = sphi 0, %s111
      %s114 = sphi 0, %s113
      %s128 = sphi 0, %s114
      %s134 = sphi 0, %s136
      %s137 = sphi 0, %s134
      %s138 = sphi 0, %s137
      %s154 = sphi 0, %s138
    $region4: #{encoder_decoder_forward.1} parent=1 // loop_header_branch
      %17 = sbr.rel (%p15) target = $region8
    $region5: #{encoder_decoder_forward.1} parent=1 // loop_body
      %s19 = ssub.s32 %s14, 1
      %s20 = ssub.s32 %s14, 2
      %s21 = sadd.s32 %s14, 1
      %s22 = ssub.s32 %s14, %s21
      %p23 = scmp.eq.s32.totalorder %s22, 0
      %s25 = sadd.s32 %s24, 1
      %s26 = scalar_select %p23, %s24, %s25
      %p29 = pneg %p23
      %p30 = scmp.eq.s32.totalorder %s14, 1
      %p31 = por %p29, %p30
      %p32 = scmp.ne.s32.totalorder %s24, %s27
      %p33 = scmp.eq.s32.totalorder %s14, 0
      %p34 = por %p32, %p33
      %p35 = scmp.ne.s32.totalorder %s24, %s27
      %p36 = scmp.eq.s32.totalorder %s19, 1
      %p37 = por %p35, %p36
      %p38 = scmp.ne.s32.totalorder %s27, %s28
      %p39 = scmp.eq.s32.totalorder %s19, 0
      %p40 = por %p38, %p39
      %p41 = scmp.ne.s32.totalorder %s27, %s28
      %p42 = scmp.eq.s32.totalorder %s20, 1
      %p43 = por %p41, %p42
      %p45 = scmp.ne.s32.totalorder %s28, %s44
      %p46 = scmp.eq.s32.totalorder %s20, 0
      %p47 = por %p45, %p46
      %s49 = sadd.s32 %s48, 1
      %p52 = scmp.eq.s32.totalorder %s14, 1
      %p53 = scmp.ne.s32.totalorder %s48, %s50
      %p54 = scmp.eq.s32.totalorder %s14, 0
      %p55 = por %p53, %p54
      %p56 = scmp.ne.s32.totalorder %s48, %s50
      %p57 = scmp.eq.s32.totalorder %s19, 1
      %p58 = por %p56, %p57
      %p59 = scmp.ne.s32.totalorder %s50, %s51
      %p60 = scmp.eq.s32.totalorder %s19, 0
      %p61 = por %p59, %p60
      %p62 = scmp.ne.s32.totalorder %s50, %s51
      %p63 = scmp.eq.s32.totalorder %s20, 1
      %p64 = por %p62, %p63
      %p66 = scmp.ne.s32.totalorder %s51, %s65
      %p67 = scmp.eq.s32.totalorder %s20, 0
      %p68 = por %p66, %p67
      %s70 = sadd.s32 %s69, 1
      %p73 = scmp.eq.s32.totalorder %s14, 1
      %p74 = scmp.ne.s32.totalorder %s69, %s71
      %p75 = scmp.eq.s32.totalorder %s14, 0
      %p76 = por %p74, %p75
      %p77 = scmp.ne.s32.totalorder %s69, %s71
      %p78 = scmp.eq.s32.totalorder %s19, 1
      %p79 = por %p77, %p78
      %p80 = scmp.ne.s32.totalorder %s71, %s72
      %p81 = scmp.eq.s32.totalorder %s19, 0
      %p82 = por %p80, %p81
      %p83 = scmp.ne.s32.totalorder %s71, %s72
      %p84 = scmp.eq.s32.totalorder %s20, 1
      %p85 = por %p83, %p84
      %p87 = scmp.ne.s32.totalorder %s72, %s86
      %p88 = scmp.eq.s32.totalorder %s20, 0
      %p89 = por %p87, %p88
      %s91 = sadd.s32 %s90, 1
      %p94 = scmp.eq.s32.totalorder %s14, 1
      %p95 = scmp.ne.s32.totalorder %s90, %s92
      %p96 = scmp.eq.s32.totalorder %s14, 0
      %p97 = por %p95, %p96
      %p98 = scmp.ne.s32.totalorder %s90, %s92
      %p99 = scmp.eq.s32.totalorder %s19, 1
      %p100 = por %p98, %p99
      %p101 = scmp.ne.s32.totalorder %s92, %s93
      %p102 = scmp.eq.s32.totalorder %s19, 0
      %p103 = por %p101, %p102
      %p104 = scmp.ne.s32.totalorder %s92, %s93
      %p105 = scmp.eq.s32.totalorder %s20, 1
      %p106 = por %p104, %p105
      %p108 = scmp.ne.s32.totalorder %s93, %s107
      %p109 = scmp.eq.s32.totalorder %s20, 0
      %p110 = por %p108, %p109
      %s112 = sadd.s32 %s111, 1
      %p115 = scmp.eq.s32.totalorder %s14, 1
      %p116 = scmp.ne.s32.totalorder %s111, %s113
      %p117 = scmp.eq.s32.totalorder %s14, 0
      %p118 = por %p116, %p117
      %p119 = scmp.ne.s32.totalorder %s111, %s113
      %p120 = scmp.eq.s32.totalorder %s19, 1
      %p121 = por %p119, %p120
      %p122 = scmp.ne.s32.totalorder %s113, %s114
      %p123 = scmp.eq.s32.totalorder %s19, 0
      %p124 = por %p122, %p123
      %p125 = scmp.ne.s32.totalorder %s113, %s114
      %p126 = scmp.eq.s32.totalorder %s20, 1
      %p127 = por %p125, %p126
      %p129 = scmp.ne.s32.totalorder %s114, %s128
      %p130 = scmp.eq.s32.totalorder %s20, 0
      %p131 = por %p129, %p130
      %s132 = ssub.s32 %s14, %s21
      %p133 = scmp.eq.s32.totalorder %s132, 0
      %s135 = sadd.s32 %s134, 1
      %s136 = scalar_select %p133, %s134, %s135
      %p139 = pneg %p133
      %p140 = scmp.eq.s32.totalorder %s14, 1
      %p141 = por %p139, %p140
      %p142 = scmp.ne.s32.totalorder %s134, %s137
      %p143 = scmp.eq.s32.totalorder %s14, 0
      %p144 = por %p142, %p143
      %p145 = scmp.ne.s32.totalorder %s134, %s137
      %p146 = scmp.eq.s32.totalorder %s19, 1
      %p147 = por %p145, %p146
      %p148 = scmp.ne.s32.totalorder %s137, %s138
      %p149 = scmp.eq.s32.totalorder %s19, 0
      %p150 = por %p148, %p149
      %p151 = scmp.ne.s32.totalorder %s137, %s138
      %p152 = scmp.eq.s32.totalorder %s20, 1
      %p153 = por %p151, %p152
      %p155 = scmp.ne.s32.totalorder %s138, %s154
      %p156 = scmp.eq.s32.totalorder %s20, 0
      %p157 = por %p155, %p156
      %p158 = scmp.le.s32.totalorder 1, %s14
      %p159 = scmp.lt.s32.totalorder %s14, 3
      %p160 = pnand %p158, %p159
      %p161 = pneg %p160
      // Predicated region
      $region9: #{encoder_decoder_forward.1} parent=5 // pred_check
        _
      $region10: #{encoder_decoder_forward.1} parent=5 // pred_check_branch
        %163 = sbr.rel (%p160) target = $region12
      $region11: #{encoder_decoder_forward.1} parent=5 // pred_region
        %s164 = ssub.s32 %s14, 1
        // Predicated region
        $region13: #{encoder_decoder_forward.1} parent=11 // pred_check
          %p165 = pneg %p61
        $region14: #{encoder_decoder_forward.1} parent=11 // pred_check_branch
          %167 = sbr.rel (%p165) target = $region16
        $region15: #{encoder_decoder_forward.1} parent=11 // pred_region
          _
        $region16: #{encoder_decoder_forward.1} parent=11 // pred_fallthru
          _
        // Predicated region
        $region17: #{encoder_decoder_forward.1} parent=11 // pred_check
          %p168 = pneg %p82
        $region18: #{encoder_decoder_forward.1} parent=11 // pred_check_branch
          %170 = sbr.rel (%p168) target = $region20
        $region19: #{encoder_decoder_forward.1} parent=11 // pred_region
          _
        $region20: #{encoder_decoder_forward.1} parent=11 // pred_fallthru
          _
        // Predicated region
        $region21: #{encoder_decoder_forward.1} parent=11 // pred_check
          %p171 = pneg %p103
        $region22: #{encoder_decoder_forward.1} parent=11 // pred_check_branch
          %173 = sbr.rel (%p171) target = $region24
        $region23: #{encoder_decoder_forward.1} parent=11 // pred_region
          _
        $region24: #{encoder_decoder_forward.1} parent=11 // pred_fallthru
          _
        // Predicated region
        $region25: #{encoder_decoder_forward.1} parent=11 // pred_check
          %p174 = pneg %p124
        $region26: #{encoder_decoder_forward.1} parent=11 // pred_check_branch
          %176 = sbr.rel (%p174) target = $region28
        $region27: #{encoder_decoder_forward.1} parent=11 // pred_region
          _
        $region28: #{encoder_decoder_forward.1} parent=11 // pred_fallthru
          _
      $region12: #{encoder_decoder_forward.1} parent=5 // pred_fallthru
        _
      %p177 = scmp.lt.s32.totalorder %s14, 2
      // Predicated region
      $region29: #{encoder_decoder_forward.1} parent=5 // pred_check
        %p178 = pneg %p177
      $region30: #{encoder_decoder_forward.1} parent=5 // pred_check_branch
        %180 = sbr.rel (%p178) target = $region32
      $region31: #{encoder_decoder_forward.1} parent=5 // pred_region
        // Predicated region
        $region33: #{encoder_decoder_forward.1} parent=31 // pred_check
          %p181 = pneg %p34
        $region34: #{encoder_decoder_forward.1} parent=31 // pred_check_branch
          %183 = sbr.rel (%p181) target = $region36
        $region35: #{encoder_decoder_forward.1} parent=31 // pred_region
          %p184 = scmp.lt.s32.totalorder %s14, 1
          %s185 = scalar_select %p184, %s14, 1
          %s186 = smul.addr %s185, 80
          %s187 = smul.addr %s186, 4
          %s188 = scalar_lea.vmem %s0, %s187
        $region36: #{encoder_decoder_forward.1} parent=31 // pred_fallthru
          _
      $region32: #{encoder_decoder_forward.1} parent=5 // pred_fallthru
        _
      %p189 = scmp.le.s32.totalorder 1, %s14
      %p190 = scmp.lt.s32.totalorder %s14, 3
      %p191 = pnand %p189, %p190
      %p192 = pneg %p191
      // Predicated region
      $region37: #{encoder_decoder_forward.1} parent=5 // pred_check
        _
      $region38: #{encoder_decoder_forward.1} parent=5 // pred_check_branch
        %194 = sbr.rel (%p191) target = $region40
      $region39: #{encoder_decoder_forward.1} parent=5 // pred_region
        %s195 = ssub.s32 %s14, 1
        %p196 = scmp.lt.s32.totalorder %s19, 1
        %s197 = scalar_select %p196, %s19, 1
        %s198 = smul.addr %s197, 80
        %s199 = smul.addr %s198, 4
        %s200 = scalar_lea.vmem %s0, %s199
        %p201 = pneg %p40
        %p202 = pneg %p37
        %p203 = pneg %p61
        %p204 = pneg %p58
        %p205 = pneg %p82
        %p206 = pneg %p79
        %p207 = pneg %p103
        %p208 = pneg %p100
        %p209 = pneg %p124
        %p210 = pneg %p121
        %p211 = pneg %p150
        %p212 = pneg %p147
        %s213 = sand.u32 %s137, 1
        %s214 = scalar_lea.sflag [#allocation3], %s213
        %s215 = sand.u32 %s137, 1
        %s216 = scalar_lea.vmem [#allocation2], %s215
        %p217 = scmp.lt.s32.totalorder %s19, 1
        %s218 = scalar_select %p217, %s19, 1
        %s219 = smul.addr %s218, 80
        %s220 = smul.addr %s219, 4
        %s221 = scalar_lea.vmem %s0, %s220
        %v223 = vld [vmem:[%s2] sm:$0x1]
        %v224 = vld [vmem:[%s221] sm:$0xf]
        %v225 = vld [vmem:[%s221 + $0x4] sm:$0xf]
        %v226 = vld [vmem:[%s221 + $0x8] sm:$0xf]
        %v227 = vld [vmem:[%s221 + $0xc] sm:$0xf]
        %v228 = vld [vmem:[%s221 + $0x10] sm:$0xf]
        %v229 = vld [vmem:[%s221 + $0x14] sm:$0xf]
        %v230 = vld [vmem:[%s221 + $0x18] sm:$0xf]
        %v231 = vld [vmem:[%s221 + $0x1c] sm:$0xf]
        %v232 = vld [vmem:[%s221 + $0x20] sm:$0xf]
        %v233 = vld [vmem:[%s221 + $0x24] sm:$0xf]
        %v234 = vld [vmem:[%s221 + $0x28] sm:$0xf]
        %v235 = vld [vmem:[%s221 + $0x2c] sm:$0xf]
        %v236 = vld [vmem:[%s221 + $0x30] sm:$0xf]
        %v237 = vld [vmem:[%s221 + $0x34] sm:$0xf]
        %v238 = vld [vmem:[%s221 + $0x38] sm:$0xf]
        %v239 = vld [vmem:[%s221 + $0x3c] sm:$0xf]
        %v240 = vld [vmem:[%s1] sm:$0xf]
        %v241 = vld [vmem:[%s1 + $0x4] sm:$0xf]
        %v242 = vld [vmem:[%s1 + $0x8] sm:$0xf]
        %v243 = vld [vmem:[%s1 + $0xc] sm:$0xf]
        %v244 = vld [vmem:[%s221 + $0x40] sm:$0xf]
        %v245 = vld [vmem:[%s221 + $0x44] sm:$0xf]
        %v246 = vld [vmem:[%s221 + $0x48] sm:$0xf]
        %v247 = vld [vmem:[%s221 + $0x4c] sm:$0xf]
        %v248 = vld [vmem:[%s221 + $0x50] sm:$0xf]
        %v249 = vld [vmem:[%s221 + $0x54] sm:$0xf]
        %v250 = vld [vmem:[%s221 + $0x58] sm:$0xf]
        %v251 = vld [vmem:[%s221 + $0x5c] sm:$0xf]
        %s252 = scalar_lea.vmem %s1, 16
        %v253 = vld [vmem:[%s252] sm:$0xf]
        %v254 = vld [vmem:[%s252 + $0x4] sm:$0xf]
        %v255 = vld [vmem:[%s252 + $0x8] sm:$0xf]
        %v256 = vld [vmem:[%s252 + $0xc] sm:$0xf]
        %v273 = vunpack.c.l.b16 %v232
        %v274 = vunpack.c.l.b16 %v233
        %v275 = vunpack.c.l.b16 %v234
        %v276 = vunpack.c.l.b16 %v235
        %v277 = vunpack.c.l.b16 %v236
        %v278 = vunpack.c.l.b16 %v237
        %v279 = vunpack.c.l.b16 %v238
        %v280 = vunpack.c.l.b16 %v239
        %v281 = vunpack.c.l.b16 %v244
        %v282 = vunpack.c.l.b16 %v245
        %v283 = vunpack.c.l.b16 %v246
        %v284 = vunpack.c.l.b16 %v247
        %v285 = vunpack.c.l.b16 %v248
        %v286 = vunpack.c.l.b16 %v249
        %v287 = vunpack.c.l.b16 %v250
        %v288 = vunpack.c.l.b16 %v251
        %v289 = vpack.c.b16 %v274, %v273
        %v290 = vpack.c.b16 %v276, %v275
        %v291 = vpack.c.b16 %v278, %v277
        %v292 = vpack.c.b16 %v280, %v279
        %v293 = vpack.c.b16 %v282, %v281
        %v294 = vpack.c.b16 %v284, %v283
        %v295 = vpack.c.b16 %v286, %v285
        %v296 = vpack.c.b16 %v288, %v287
        %v301 = vunpack.c.l.b16 %v253
        %v302 = vunpack.c.l.b16 %v254
        %v303 = vunpack.c.l.b16 %v255
        %v304 = vunpack.c.l.b16 %v256
        %v305 = vpack.c.b16 %v302, %v301
        %v306 = vpack.c.b16 %v304, %v303
        %vm309 = vcmask 261120
        %v311 = vsel %vm309, %v289, 0
        %v314 = vsel %vm309, %v290, 0
        %v317 = vsel %vm309, %v291, 0
        %v320 = vsel %vm309, %v292, 0
        %v323 = vsel %vm309, %v293, 0
        %v326 = vsel %vm309, %v294, 0
        %v329 = vsel %vm309, %v295, 0
        %v332 = vsel %vm309, %v296, 0
        %334 = vmatprep.subr.bf16.mxu0 0
        %335 = vmatpush1.bf16.msra.mxu0 %v305
        %336 = vmatprep.subr.bf16.mxu0 0
        %337 = vmatpush1.bf16.msra.mxu0 %v306
        %338 = vmatprep.subr.bf16.mxu0 0
        %339 = vmatpush1.bf16.msra.mxu0 0
        %340 = vmatprep.subr.bf16.mxu0 0
        %341 = vmatpush1.bf16.msra.mxu0 0
        %342 = vmatprep.subr.bf16.mxu0 0
        %343 = vmatpush1.bf16.msra.mxu0 0
        %344 = vmatprep.subr.bf16.mxu0 0
        %345 = vmatpush1.bf16.msra.mxu0 0
        %346 = vmatprep.subr.bf16.mxu0 0
        %347 = vmatpush1.bf16.msra.mxu0 0
        %348 = vmatprep.subr.bf16.mxu0 0
        %349 = vmatpush1.bf16.msra.mxu0 0
        %350 = vmatprep.subr.bf16.mxu0 0
        %351 = vmatpush1.bf16.msra.mxu0 0
        %352 = vmatprep.subr.bf16.mxu0 0
        %353 = vmatpush1.bf16.msra.mxu0 0
        %354 = vmatprep.subr.bf16.mxu0 0
        %355 = vmatpush1.bf16.msra.mxu0 0
        %356 = vmatprep.subr.bf16.mxu0 0
        %357 = vmatpush1.bf16.msra.mxu0 0
        %358 = vmatprep.subr.bf16.mxu0 0
        %359 = vmatpush1.bf16.msra.mxu0 0
        %360 = vmatprep.subr.bf16.mxu0 0
        %361 = vmatpush1.bf16.msra.mxu0 0
        %362 = vmatprep.subr.bf16.mxu0 0
        %363 = vmatpush1.bf16.msra.mxu0 0
        %364 = vmatprep.subr.bf16.mxu0 0
        %365 = vmatpush1.bf16.msra.mxu0 0
        %366 = vmatprep.mubr.bf16.mxu0 0
        %367 = vmatmul.mubr.bf16.gmra.mrb[0].mxu0 %v311
        %v368 = vpop.f32.mrb[0].mxu0
        %v369 = vadd.f32 0.0, %v368
        %v370 = vpop.f32.mrb[0].mxu0
        %v371 = vpop.f32.mrb[0].mxu0
        %v372 = vadd.f32 0.0, %v371
        %v373 = vpop.f32.mrb[0].mxu0
        %374 = vmatprep.mubr.bf16.mxu0 0
        %375 = vmatmul.mubr.bf16.gmra.mrb[0].mxu0 %v314
        %v376 = vpop.f32.mrb[0].mxu0
        %v377 = vadd.f32 0.0, %v376
        %v378 = vpop.f32.mrb[0].mxu0
        %v379 = vpop.f32.mrb[0].mxu0
        %v380 = vadd.f32 0.0, %v379
        %v381 = vpop.f32.mrb[0].mxu0
        %382 = vmatprep.mubr.bf16.mxu0 0
        %383 = vmatmul.mubr.bf16.gmra.mrb[0].mxu0 %v317
        %v384 = vpop.f32.mrb[0].mxu0
        %v385 = vadd.f32 0.0, %v384
        %v386 = vpop.f32.mrb[0].mxu0
        %v387 = vpop.f32.mrb[0].mxu0
        %v388 = vadd.f32 0.0, %v387
        %v389 = vpop.f32.mrb[0].mxu0
        %390 = vmatprep.mubr.bf16.mxu0 0
        %391 = vmatmul.mubr.bf16.gmra.mrb[0].mxu0 %v320
        %v392 = vpop.f32.mrb[0].mxu0
        %v393 = vadd.f32 0.0, %v392
        %v394 = vpop.f32.mrb[0].mxu0
        %v395 = vpop.f32.mrb[0].mxu0
        %v396 = vadd.f32 0.0, %v395
        %v397 = vpop.f32.mrb[0].mxu0
        %398 = vmatprep.mubr.bf16.mxu0 0
        %399 = vmatmul.mubr.bf16.gmra.mrb[0].mxu0 %v323
        %v400 = vpop.f32.mrb[0].mxu0
        %v401 = vadd.f32 0.0, %v400
        %v402 = vpop.f32.mrb[0].mxu0
        %v403 = vpop.f32.mrb[0].mxu0
        %v404 = vadd.f32 0.0, %v403
        %v405 = vpop.f32.mrb[0].mxu0
        %406 = vmatprep.mubr.bf16.mxu0 0
        %407 = vmatmul.mubr.bf16.gmra.mrb[0].mxu0 %v326
        %v408 = vpop.f32.mrb[0].mxu0
        %v409 = vadd.f32 0.0, %v408
        %v410 = vpop.f32.mrb[0].mxu0
        %v411 = vpop.f32.mrb[0].mxu0
        %v412 = vadd.f32 0.0, %v411
        %v413 = vpop.f32.mrb[0].mxu0
        %414 = vmatprep.mubr.bf16.mxu0 0
        %415 = vmatmul.mubr.bf16.gmra.mrb[0].mxu0 %v329
        %v416 = vpop.f32.mrb[0].mxu0
        %v417 = vadd.f32 0.0, %v416
        %v418 = vpop.f32.mrb[0].mxu0
        %v419 = vpop.f32.mrb[0].mxu0
        %v420 = vadd.f32 0.0, %v419
        %v421 = vpop.f32.mrb[0].mxu0
        %422 = vmatprep.mubr.bf16.mxu0 0
        %423 = vmatmul.mubr.bf16.gmra.mrb[0].mxu0 %v332
        %v424 = vpop.f32.mrb[0].mxu0
        %v425 = vadd.f32 0.0, %v424
        %v426 = vpop.f32.mrb[0].mxu0
        %v427 = vpop.f32.mrb[0].mxu0
        %v428 = vadd.f32 0.0, %v427
        %v429 = vpop.f32.mrb[0].mxu0
        %430 = vdwg.mxu0
        %v439 = vunpack.c.l.b16 %v224
        %v440 = vunpack.c.l.b16 %v225
        %v441 = vunpack.c.l.b16 %v226
        %v442 = vunpack.c.l.b16 %v227
        %v443 = vunpack.c.l.b16 %v228
        %v444 = vunpack.c.l.b16 %v229
        %v445 = vunpack.c.l.b16 %v230
        %v446 = vunpack.c.l.b16 %v231
        %v447 = vpack.c.b16 %v440, %v439
        %v448 = vpack.c.b16 %v442, %v441
        %v449 = vpack.c.b16 %v444, %v443
        %v450 = vpack.c.b16 %v446, %v445
        %v455 = vunpack.c.l.b16 %v240
        %v456 = vunpack.c.l.b16 %v241
        %v457 = vunpack.c.l.b16 %v242
        %v458 = vunpack.c.l.b16 %v243
        %v459 = vpack.c.b16 %v456, %v455
        %v460 = vpack.c.b16 %v458, %v457
        %v464 = vsel %vm309, %v447, 0
        %v467 = vsel %vm309, %v448, 0
        %v470 = vsel %vm309, %v449, 0
        %v473 = vsel %vm309, %v450, 0
        %475 = vmatprep.subr.bf16.mxu0 0
        %476 = vmatpush1.bf16.msra.mxu0 %v459
        %477 = vmatprep.subr.bf16.mxu0 0
        %478 = vmatpush1.bf16.msra.mxu0 %v460
        %479 = vmatprep.subr.bf16.mxu0 0
        %480 = vmatpush1.bf16.msra.mxu0 0
        %481 = vmatprep.subr.bf16.mxu0 0
        %482 = vmatpush1.bf16.msra.mxu0 0
        %483 = vmatprep.subr.bf16.mxu0 0
        %484 = vmatpush1.bf16.msra.mxu0 0
        %485 = vmatprep.subr.bf16.mxu0 0
        %486 = vmatpush1.bf16.msra.mxu0 0
        %487 = vmatprep.subr.bf16.mxu0 0
        %488 = vmatpush1.bf16.msra.mxu0 0
        %489 = vmatprep.subr.bf16.mxu0 0
        %490 = vmatpush1.bf16.msra.mxu0 0
        %491 = vmatprep.subr.bf16.mxu0 0
        %492 = vmatpush1.bf16.msra.mxu0 0
        %493 = vmatprep.subr.bf16.mxu0 0
        %494 = vmatpush1.bf16.msra.mxu0 0
        %495 = vmatprep.subr.bf16.mxu0 0
        %496 = vmatpush1.bf16.msra.mxu0 0
        %497 = vmatprep.subr.bf16.mxu0 0
        %498 = vmatpush1.bf16.msra.mxu0 0
        %499 = vmatprep.subr.bf16.mxu0 0
        %500 = vmatpush1.bf16.msra.mxu0 0
        %501 = vmatprep.subr.bf16.mxu0 0
        %502 = vmatpush1.bf16.msra.mxu0 0
        %503 = vmatprep.subr.bf16.mxu0 0
        %504 = vmatpush1.bf16.msra.mxu0 0
        %505 = vmatprep.subr.bf16.mxu0 0
        %506 = vmatpush1.bf16.msra.mxu0 0
        %507 = vmatprep.mubr.bf16.mxu0 0
        %508 = vmatmul.mubr.bf16.gmra.mrb[0].mxu0 %v464
        %v509 = vpop.f32.mrb[0].mxu0
        %v510 = vadd.f32 %v369, %v509
        %v511 = vpop.f32.mrb[0].mxu0
        %v512 = vpop.f32.mrb[0].mxu0
        %v513 = vadd.f32 %v372, %v512
        %v514 = vpop.f32.mrb[0].mxu0
        %515 = vmatprep.mubr.bf16.mxu0 0
        %516 = vmatmul.mubr.bf16.gmra.mrb[0].mxu0 %v467
        %v517 = vpop.f32.mrb[0].mxu0
        %v518 = vadd.f32 %v377, %v517
        %v519 = vpop.f32.mrb[0].mxu0
        %v520 = vpop.f32.mrb[0].mxu0
        %v521 = vadd.f32 %v380, %v520
        %v522 = vpop.f32.mrb[0].mxu0
        %523 = vmatprep.mubr.bf16.mxu0 0
        %524 = vmatmul.mubr.bf16.gmra.mrb[0].mxu0 %v470
        %v525 = vpop.f32.mrb[0].mxu0
        %v526 = vadd.f32 %v385, %v525
        %v527 = vpop.f32.mrb[0].mxu0
        %v528 = vpop.f32.mrb[0].mxu0
        %v529 = vadd.f32 %v388, %v528
        %v530 = vpop.f32.mrb[0].mxu0
        %531 = vmatprep.mubr.bf16.mxu0 0
        %532 = vmatmul.mubr.bf16.gmra.mrb[0].mxu0 %v473
        %v533 = vpop.f32.mrb[0].mxu0
        %v534 = vadd.f32 %v393, %v533
        %v535 = vpop.f32.mrb[0].mxu0
        %v536 = vpop.f32.mrb[0].mxu0
        %v537 = vadd.f32 %v396, %v536
        %v538 = vpop.f32.mrb[0].mxu0
        %539 = vmatprep.mubr.bf16.mxu0 0
        %540 = vmatmul.mubr.bf16.gmra.mrb[0].mxu0 %v311
        %v541 = vpop.f32.mrb[0].mxu0
        %v542 = vadd.f32 %v401, %v541
        %v543 = vpop.f32.mrb[0].mxu0
        %v544 = vpop.f32.mrb[0].mxu0
        %v545 = vadd.f32 %v404, %v544
        %v546 = vpop.f32.mrb[0].mxu0
        %547 = vmatprep.mubr.bf16.mxu0 0
        %548 = vmatmul.mubr.bf16.gmra.mrb[0].mxu0 %v314
        %v549 = vpop.f32.mrb[0].mxu0
        %v550 = vadd.f32 %v409, %v549
        %v551 = vpop.f32.mrb[0].mxu0
        %v552 = vpop.f32.mrb[0].mxu0
        %v553 = vadd.f32 %v412, %v552
        %v554 = vpop.f32.mrb[0].mxu0
        %555 = vmatprep.mubr.bf16.mxu0 0
        %556 = vmatmul.mubr.bf16.gmra.mrb[0].mxu0 %v317
        %v557 = vpop.f32.mrb[0].mxu0
        %v558 = vadd.f32 %v417, %v557
        %v559 = vpop.f32.mrb[0].mxu0
        %v560 = vpop.f32.mrb[0].mxu0
        %v561 = vadd.f32 %v420, %v560
        %v562 = vpop.f32.mrb[0].mxu0
        %563 = vmatprep.mubr.bf16.mxu0 0
        %564 = vmatmul.mubr.bf16.gmra.mrb[0].mxu0 %v320
        %v565 = vpop.f32.mrb[0].mxu0
        %v566 = vadd.f32 %v425, %v565
        %v567 = vpop.f32.mrb[0].mxu0
        %v568 = vpop.f32.mrb[0].mxu0
        %v569 = vadd.f32 %v428, %v568
        %v570 = vpop.f32.mrb[0].mxu0
        %571 = vdwg.mxu0
        %v572 = vld [vmem:[%s221 + $0x40] sm:$0xf]
        %v573 = vld [vmem:[%s221 + $0x44] sm:$0xf]
        %v574 = vld [vmem:[%s221 + $0x48] sm:$0xf]
        %v575 = vld [vmem:[%s221 + $0x4c] sm:$0xf]
        %v576 = vld [vmem:[%s221 + $0x50] sm:$0xf]
        %v577 = vld [vmem:[%s221 + $0x54] sm:$0xf]
        %v578 = vld [vmem:[%s221 + $0x58] sm:$0xf]
        %v579 = vld [vmem:[%s221 + $0x5c] sm:$0xf]
        %v580 = vld [vmem:[%s221 + $0x60] sm:$0xf]
        %v581 = vld [vmem:[%s221 + $0x64] sm:$0xf]
        %v582 = vld [vmem:[%s221 + $0x68] sm:$0xf]
        %v583 = vld [vmem:[%s221 + $0x6c] sm:$0xf]
        %v584 = vld [vmem:[%s221 + $0x70] sm:$0xf]
        %v585 = vld [vmem:[%s221 + $0x74] sm:$0xf]
        %v586 = vld [vmem:[%s221 + $0x78] sm:$0xf]
        %v587 = vld [vmem:[%s221 + $0x7c] sm:$0xf]
        %s588 = scalar_lea.vmem %s1, 32
        %v589 = vld [vmem:[%s588] sm:$0xf]
        %v590 = vld [vmem:[%s588 + $0x4] sm:$0xf]
        %v591 = vld [vmem:[%s588 + $0x8] sm:$0xf]
        %v592 = vld [vmem:[%s588 + $0xc] sm:$0xf]
        %v609 = vunpack.c.l.b16 %v572
        %v610 = vunpack.c.l.b16 %v573
        %v611 = vunpack.c.l.b16 %v574
        %v612 = vunpack.c.l.b16 %v575
        %v613 = vunpack.c.l.b16 %v576
        %v614 = vunpack.c.l.b16 %v577
        %v615 = vunpack.c.l.b16 %v578
        %v616 = vunpack.c.l.b16 %v579
        %v617 = vunpack.c.l.b16 %v580
        %v618 = vunpack.c.l.b16 %v581
        %v619 = vunpack.c.l.b16 %v582
        %v620 = vunpack.c.l.b16 %v583
        %v621 = vunpack.c.l.b16 %v584
        %v622 = vunpack.c.l.b16 %v585
        %v623 = vunpack.c.l.b16 %v586
        %v624 = vunpack.c.l.b16 %v587
        %v625 = vpack.c.b16 %v610, %v609
        %v626 = vpack.c.b16 %v612, %v611
        %v627 = vpack.c.b16 %v614, %v613
        %v628 = vpack.c.b16 %v616, %v615
        %v629 = vpack.c.b16 %v618, %v617
        %v630 = vpack.c.b16 %v620, %v619
        %v631 = vpack.c.b16 %v622, %v621
        %v632 = vpack.c.b16 %v624, %v623
        %v637 = vunpack.c.l.b16 %v589
        %v638 = vunpack.c.l.b16 %v590
        %v639 = vunpack.c.l.b16 %v591
        %v640 = vunpack.c.l.b16 %v592
        %v641 = vpack.c.b16 %v638, %v637
        %v642 = vpack.c.b16 %v640, %v639
        %v646 = vsel %vm309, %v625, 0
        %v649 = vsel %vm309, %v626, 0
        %v652 = vsel %vm309, %v627, 0
        %v655 = vsel %vm309, %v628, 0
        %v658 = vsel %vm309, %v629, 0
        %v661 = vsel %vm309, %v630, 0
        %v664 = vsel %vm309, %v631, 0
        %v667 = vsel %vm309, %v632, 0
        %669 = vmatprep.subr.bf16.mxu0 0
        %670 = vmatpush1.bf16.msra.mxu0 %v641
        %671 = vmatprep.subr.bf16.mxu0 0
        %672 = vmatpush1.bf16.msra.mxu0 %v642
        %673 = vmatprep.subr.bf16.mxu0 0
        %674 = vmatpush1.bf16.msra.mxu0 0
        %675 = vmatprep.subr.bf16.mxu0 0
        %676 = vmatpush1.bf16.msra.mxu0 0
        %677 = vmatprep.subr.bf16.mxu0 0
        %678 = vmatpush1.bf16.msra.mxu0 0
        %679 = vmatprep.subr.bf16.mxu0 0
        %680 = vmatpush1.bf16.msra.mxu0 0
        %681 = vmatprep.subr.bf16.mxu0 0
        %682 = vmatpush1.bf16.msra.mxu0 0
        %683 = vmatprep.subr.bf16.mxu0 0
        %684 = vmatpush1.bf16.msra.mxu0 0
        %685 = vmatprep.subr.bf16.mxu0 0
        %686 = vmatpush1.bf16.msra.mxu0 0
        %687 = vmatprep.subr.bf16.mxu0 0
        %688 = vmatpush1.bf16.msra.mxu0 0
        %689 = vmatprep.subr.bf16.mxu0 0
        %690 = vmatpush1.bf16.msra.mxu0 0
        %691 = vmatprep.subr.bf16.mxu0 0
        %692 = vmatpush1.bf16.msra.mxu0 0
        %693 = vmatprep.subr.bf16.mxu0 0
        %694 = vmatpush1.bf16.msra.mxu0 0
        %695 = vmatprep.subr.bf16.mxu0 0
        %696 = vmatpush1.bf16.msra.mxu0 0
        %697 = vmatprep.subr.bf16.mxu0 0
        %698 = vmatpush1.bf16.msra.mxu0 0
        %699 = vmatprep.subr.bf16.mxu0 0
        %700 = vmatpush1.bf16.msra.mxu0 0
        %701 = vmatprep.mubr.bf16.mxu0 0
        %702 = vmatmul.mubr.bf16.gmra.mrb[0].mxu0 %v646
        %v703 = vpop.f32.mrb[0].mxu0
        %v704 = vadd.f32 0.0, %v703
        %v705 = vpop.f32.mrb[0].mxu0
        %v706 = vpop.f32.mrb[0].mxu0
        %v707 = vadd.f32 0.0, %v706
        %v708 = vpop.f32.mrb[0].mxu0
        %709 = vmatprep.mubr.bf16.mxu0 0
        %710 = vmatmul.mubr.bf16.gmra.mrb[0].mxu0 %v649
        %v711 = vpop.f32.mrb[0].mxu0
        %v712 = vadd.f32 0.0, %v711
        %v713 = vpop.f32.mrb[0].mxu0
        %v714 = vpop.f32.mrb[0].mxu0
        %v715 = vadd.f32 0.0, %v714
        %v716 = vpop.f32.mrb[0].mxu0
        %717 = vmatprep.mubr.bf16.mxu0 0
        %718 = vmatmul.mubr.bf16.gmra.mrb[0].mxu0 %v652
        %v719 = vpop.f32.mrb[0].mxu0
        %v720 = vadd.f32 0.0, %v719
        %v721 = vpop.f32.mrb[0].mxu0
        %v722 = vpop.f32.mrb[0].mxu0
        %v723 = vadd.f32 0.0, %v722
        %v724 = vpop.f32.mrb[0].mxu0
        %725 = vmatprep.mubr.bf16.mxu0 0
        %726 = vmatmul.mubr.bf16.gmra.mrb[0].mxu0 %v655
        %v727 = vpop.f32.mrb[0].mxu0
        %v728 = vadd.f32 0.0, %v727
        %v729 = vpop.f32.mrb[0].mxu0
        %v730 = vpop.f32.mrb[0].mxu0
        %v731 = vadd.f32 0.0, %v730
        %v732 = vpop.f32.mrb[0].mxu0
        %733 = vmatprep.mubr.bf16.mxu0 0
        %734 = vmatmul.mubr.bf16.gmra.mrb[0].mxu0 %v658
        %v735 = vpop.f32.mrb[0].mxu0
        %v736 = vadd.f32 0.0, %v735
        %v737 = vpop.f32.mrb[0].mxu0
        %v738 = vpop.f32.mrb[0].mxu0
        %v739 = vadd.f32 0.0, %v738
        %v740 = vpop.f32.mrb[0].mxu0
        %741 = vmatprep.mubr.bf16.mxu0 0
        %742 = vmatmul.mubr.bf16.gmra.mrb[0].mxu0 %v661
        %v743 = vpop.f32.mrb[0].mxu0
        %v744 = vadd.f32 0.0, %v743
        %v745 = vpop.f32.mrb[0].mxu0
        %v746 = vpop.f32.mrb[0].mxu0
        %v747 = vadd.f32 0.0, %v746
        %v748 = vpop.f32.mrb[0].mxu0
        %749 = vmatprep.mubr.bf16.mxu0 0
        %750 = vmatmul.mubr.bf16.gmra.mrb[0].mxu0 %v664
        %v751 = vpop.f32.mrb[0].mxu0
        %v752 = vadd.f32 0.0, %v751
        %v753 = vpop.f32.mrb[0].mxu0
        %v754 = vpop.f32.mrb[0].mxu0
        %v755 = vadd.f32 0.0, %v754
        %v756 = vpop.f32.mrb[0].mxu0
        %757 = vmatprep.mubr.bf16.mxu0 0
        %758 = vmatmul.mubr.bf16.gmra.mrb[0].mxu0 %v667
        %v759 = vpop.f32.mrb[0].mxu0
        %v760 = vadd.f32 0.0, %v759
        %v761 = vpop.f32.mrb[0].mxu0
        %v762 = vpop.f32.mrb[0].mxu0
        %v763 = vadd.f32 0.0, %v762
        %v764 = vpop.f32.mrb[0].mxu0
        %765 = vdwg.mxu0
        %v766 = vadd.f32 %v510, %v704
        %v767 = vadd.f32 %v513, %v707
        %v768 = vadd.f32 %v518, %v712
        %v769 = vadd.f32 %v521, %v715
        %v770 = vadd.f32 %v526, %v720
        %v771 = vadd.f32 %v529, %v723
        %v772 = vadd.f32 %v534, %v728
        %v773 = vadd.f32 %v537, %v731
        %v774 = vadd.f32 %v542, %v736
        %v775 = vadd.f32 %v545, %v739
        %v776 = vadd.f32 %v550, %v744
        %v777 = vadd.f32 %v553, %v747
        %v778 = vadd.f32 %v558, %v752
        %v779 = vadd.f32 %v561, %v755
        %v780 = vadd.f32 %v566, %v760
        %v781 = vadd.f32 %v569, %v763
        %v783 = vlaneseq
        %v784 = vshrl.u32 %v783, 7
        %v785 = vsub.s32 0, %v784
        %v786 = vrot.slane %v223, %v785
        %v788 = vadd.f32 %v766, %v786
        %v789 = vadd.f32 %v767, %v786
        %v790 = vadd.f32 %v768, %v786
        %v791 = vadd.f32 %v769, %v786
        %v792 = vadd.f32 %v770, %v786
        %v793 = vadd.f32 %v771, %v786
        %v794 = vadd.f32 %v772, %v786
        %v795 = vadd.f32 %v773, %v786
        %v796 = vadd.f32 %v774, %v786
        %v797 = vadd.f32 %v775, %v786
        %v798 = vadd.f32 %v776, %v786
        %v799 = vadd.f32 %v777, %v786
        %v800 = vadd.f32 %v778, %v786
        %v801 = vadd.f32 %v779, %v786
        %v802 = vadd.f32 %v780, %v786
        %v803 = vadd.f32 %v781, %v786
        %v804 = vmax.f32 %v788, 0.0
        %v805 = vmax.f32 %v789, 0.0
        %v806 = vmax.f32 %v790, 0.0
        %v807 = vmax.f32 %v791, 0.0
        %v808 = vmax.f32 %v792, 0.0
        %v809 = vmax.f32 %v793, 0.0
        %v810 = vmax.f32 %v794, 0.0
        %v811 = vmax.f32 %v795, 0.0
        %v812 = vmax.f32 %v796, 0.0
        %v813 = vmax.f32 %v797, 0.0
        %v814 = vmax.f32 %v798, 0.0
        %v815 = vmax.f32 %v799, 0.0
        %v816 = vmax.f32 %v800, 0.0
        %v817 = vmax.f32 %v801, 0.0
        %v818 = vmax.f32 %v802, 0.0
        %v819 = vmax.f32 %v803, 0.0
        %v820 = vadd.f32 %v804, %v805
        %v821 = vadd.f32 %v820, %v806
        %v822 = vadd.f32 %v821, %v807
        %v823 = vadd.f32 %v822, %v808
        %v824 = vadd.f32 %v823, %v809
        %v825 = vadd.f32 %v824, %v810
        %v826 = vadd.f32 %v825, %v811
        %v827 = vadd.f32 %v826, %v812
        %v828 = vadd.f32 %v827, %v813
        %v829 = vadd.f32 %v828, %v814
        %v830 = vadd.f32 %v829, %v815
        %v831 = vadd.f32 %v830, %v816
        %v832 = vadd.f32 %v831, %v817
        %v833 = vadd.f32 %v832, %v818
        %v834 = vadd.f32 %v833, %v819
        %v835 = vrot.slane %v834, 4
        %v836 = vadd.f32 %v834, %v835
        %v837 = vrot.slane %v836, 2
        %v838 = vadd.f32 %v836, %v837
        %v839 = vrot.slane %v838, 1
        %v840 = vadd.f32 %v838, %v839
        %v841 = vadd.f32 %v840, 0.0
        %v842 = vld [vmem:[%s221 + $0x60] sm:$0xf]
        %v843 = vld [vmem:[%s221 + $0x64] sm:$0xf]
        %v844 = vld [vmem:[%s221 + $0x68] sm:$0xf]
        %v845 = vld [vmem:[%s221 + $0x6c] sm:$0xf]
        %v846 = vld [vmem:[%s221 + $0x70] sm:$0xf]
        %v847 = vld [vmem:[%s221 + $0x74] sm:$0xf]
        %v848 = vld [vmem:[%s221 + $0x78] sm:$0xf]
        %v849 = vld [vmem:[%s221 + $0x7c] sm:$0xf]
        %v850 = vld [vmem:[%s221 + $0x80] sm:$0xf]
        %v851 = vld [vmem:[%s221 + $0x84] sm:$0xf]
        %v852 = vld [vmem:[%s221 + $0x88] sm:$0xf]
        %v853 = vld [vmem:[%s221 + $0x8c] sm:$0xf]
        %v854 = vld [vmem:[%s221 + $0x90] sm:$0xf]
        %v855 = vld [vmem:[%s221 + $0x94] sm:$0xf]
        %v856 = vld [vmem:[%s221 + $0x98] sm:$0xf]
        %v857 = vld [vmem:[%s221 + $0x9c] sm:$0xf]
        %v874 = vunpack.c.l.b16 %v842
        %v875 = vunpack.c.l.b16 %v843
        %v876 = vunpack.c.l.b16 %v844
        %v877 = vunpack.c.l.b16 %v845
        %v878 = vunpack.c.l.b16 %v846
        %v879 = vunpack.c.l.b16 %v847
        %v880 = vunpack.c.l.b16 %v848
        %v881 = vunpack.c.l.b16 %v849
        %v882 = vunpack.c.l.b16 %v850
        %v883 = vunpack.c.l.b16 %v851
        %v884 = vunpack.c.l.b16 %v852
        %v885 = vunpack.c.l.b16 %v853
        %v886 = vunpack.c.l.b16 %v854
        %v887 = vunpack.c.l.b16 %v855
        %v888 = vunpack.c.l.b16 %v856
        %v889 = vunpack.c.l.b16 %v857
        %v890 = vpack.c.b16 %v875, %v874
        %v891 = vpack.c.b16 %v877, %v876
        %v892 = vpack.c.b16 %v879, %v878
        %v893 = vpack.c.b16 %v881, %v880
        %v894 = vpack.c.b16 %v883, %v882
        %v895 = vpack.c.b16 %v885, %v884
        %v896 = vpack.c.b16 %v887, %v886
        %v897 = vpack.c.b16 %v889, %v888
        %v899 = vsel %vm309, %v890, 0
        %v902 = vsel %vm309, %v891, 0
        %v905 = vsel %vm309, %v892, 0
        %v908 = vsel %vm309, %v893, 0
        %v911 = vsel %vm309, %v894, 0
        %v914 = vsel %vm309, %v895, 0
        %v917 = vsel %vm309, %v896, 0
        %v920 = vsel %vm309, %v897, 0
        %922 = vmatprep.subr.bf16.mxu0 0
        %923 = vmatpush1.bf16.msra.mxu0 %v305
        %924 = vmatprep.subr.bf16.mxu0 0
        %925 = vmatpush1.bf16.msra.mxu0 %v306
        %926 = vmatprep.subr.bf16.mxu0 0
        %927 = vmatpush1.bf16.msra.mxu0 0
        %928 = vmatprep.subr.bf16.mxu0 0
        %929 = vmatpush1.bf16.msra.mxu0 0
        %930 = vmatprep.subr.bf16.mxu0 0
        %931 = vmatpush1.bf16.msra.mxu0 0
        %932 = vmatprep.subr.bf16.mxu0 0
        %933 = vmatpush1.bf16.msra.mxu0 0
        %934 = vmatprep.subr.bf16.mxu0 0
        %935 = vmatpush1.bf16.msra.mxu0 0
        %936 = vmatprep.subr.bf16.mxu0 0
        %937 = vmatpush1.bf16.msra.mxu0 0
        %938 = vmatprep.subr.bf16.mxu0 0
        %939 = vmatpush1.bf16.msra.mxu0 0
        %940 = vmatprep.subr.bf16.mxu0 0
        %941 = vmatpush1.bf16.msra.mxu0 0
        %942 = vmatprep.subr.bf16.mxu0 0
        %943 = vmatpush1.bf16.msra.mxu0 0
        %944 = vmatprep.subr.bf16.mxu0 0
        %945 = vmatpush1.bf16.msra.mxu0 0
        %946 = vmatprep.subr.bf16.mxu0 0
        %947 = vmatpush1.bf16.msra.mxu0 0
        %948 = vmatprep.subr.bf16.mxu0 0
        %949 = vmatpush1.bf16.msra.mxu0 0
        %950 = vmatprep.subr.bf16.mxu0 0
        %951 = vmatpush1.bf16.msra.mxu0 0
        %952 = vmatprep.subr.bf16.mxu0 0
        %953 = vmatpush1.bf16.msra.mxu0 0
        %954 = vmatprep.mubr.bf16.mxu0 0
        %955 = vmatmul.mubr.bf16.gmra.mrb[0].mxu0 %v899
        %v956 = vpop.f32.mrb[0].mxu0
        %v957 = vadd.f32 0.0, %v956
        %v958 = vpop.f32.mrb[0].mxu0
        %v959 = vpop.f32.mrb[0].mxu0
        %v960 = vadd.f32 0.0, %v959
        %v961 = vpop.f32.mrb[0].mxu0
        %962 = vmatprep.mubr.bf16.mxu0 0
        %963 = vmatmul.mubr.bf16.gmra.mrb[0].mxu0 %v902
        %v964 = vpop.f32.mrb[0].mxu0
        %v965 = vadd.f32 0.0, %v964
        %v966 = vpop.f32.mrb[0].mxu0
        %v967 = vpop.f32.mrb[0].mxu0
        %v968 = vadd.f32 0.0, %v967
        %v969 = vpop.f32.mrb[0].mxu0
        %970 = vmatprep.mubr.bf16.mxu0 0
        %971 = vmatmul.mubr.bf16.gmra.mrb[0].mxu0 %v905
        %v972 = vpop.f32.mrb[0].mxu0
        %v973 = vadd.f32 0.0, %v972
        %v974 = vpop.f32.mrb[0].mxu0
        %v975 = vpop.f32.mrb[0].mxu0
        %v976 = vadd.f32 0.0, %v975
        %v977 = vpop.f32.mrb[0].mxu0
        %978 = vmatprep.mubr.bf16.mxu0 0
        %979 = vmatmul.mubr.bf16.gmra.mrb[0].mxu0 %v908
        %v980 = vpop.f32.mrb[0].mxu0
        %v981 = vadd.f32 0.0, %v980
        %v982 = vpop.f32.mrb[0].mxu0
        %v983 = vpop.f32.mrb[0].mxu0
        %v984 = vadd.f32 0.0, %v983
        %v985 = vpop.f32.mrb[0].mxu0
        %986 = vmatprep.mubr.bf16.mxu0 0
        %987 = vmatmul.mubr.bf16.gmra.mrb[0].mxu0 %v911
        %v988 = vpop.f32.mrb[0].mxu0
        %v989 = vadd.f32 0.0, %v988
        %v990 = vpop.f32.mrb[0].mxu0
        %v991 = vpop.f32.mrb[0].mxu0
        %v992 = vadd.f32 0.0, %v991
        %v993 = vpop.f32.mrb[0].mxu0
        %994 = vmatprep.mubr.bf16.mxu0 0
        %995 = vmatmul.mubr.bf16.gmra.mrb[0].mxu0 %v914
        %v996 = vpop.f32.mrb[0].mxu0
        %v997 = vadd.f32 0.0, %v996
        %v998 = vpop.f32.mrb[0].mxu0
        %v999 = vpop.f32.mrb[0].mxu0
        %v1000 = vadd.f32 0.0, %v999
        %v1001 = vpop.f32.mrb[0].mxu0
        %1002 = vmatprep.mubr.bf16.mxu0 0
        %1003 = vmatmul.mubr.bf16.gmra.mrb[0].mxu0 %v917
        %v1004 = vpop.f32.mrb[0].mxu0
        %v1005 = vadd.f32 0.0, %v1004
        %v1006 = vpop.f32.mrb[0].mxu0
        %v1007 = vpop.f32.mrb[0].mxu0
        %v1008 = vadd.f32 0.0, %v1007
        %v1009 = vpop.f32.mrb[0].mxu0
        %1010 = vmatprep.mubr.bf16.mxu0 0
        %1011 = vmatmul.mubr.bf16.gmra.mrb[0].mxu0 %v920
        %v1012 = vpop.f32.mrb[0].mxu0
        %v1013 = vadd.f32 0.0, %v1012
        %v1014 = vpop.f32.mrb[0].mxu0
        %v1015 = vpop.f32.mrb[0].mxu0
        %v1016 = vadd.f32 0.0, %v1015
        %v1017 = vpop.f32.mrb[0].mxu0
        %1018 = vdwg.mxu0
        %1019 = vmatprep.subr.bf16.mxu0 0
        %1020 = vmatpush1.bf16.msra.mxu0 %v459
        %1021 = vmatprep.subr.bf16.mxu0 0
        %1022 = vmatpush1.bf16.msra.mxu0 %v460
        %1023 = vmatprep.subr.bf16.mxu0 0
        %1024 = vmatpush1.bf16.msra.mxu0 0
        %1025 = vmatprep.subr.bf16.mxu0 0
        %1026 = vmatpush1.bf16.msra.mxu0 0
        %1027 = vmatprep.subr.bf16.mxu0 0
        %1028 = vmatpush1.bf16.msra.mxu0 0
        %1029 = vmatprep.subr.bf16.mxu0 0
        %1030 = vmatpush1.bf16.msra.mxu0 0
        %1031 = vmatprep.subr.bf16.mxu0 0
        %1032 = vmatpush1.bf16.msra.mxu0 0
        %1033 = vmatprep.subr.bf16.mxu0 0
        %1034 = vmatpush1.bf16.msra.mxu0 0
        %1035 = vmatprep.subr.bf16.mxu0 0
        %1036 = vmatpush1.bf16.msra.mxu0 0
        %1037 = vmatprep.subr.bf16.mxu0 0
        %1038 = vmatpush1.bf16.msra.mxu0 0
        %1039 = vmatprep.subr.bf16.mxu0 0
        %1040 = vmatpush1.bf16.msra.mxu0 0
        %1041 = vmatprep.subr.bf16.mxu0 0
        %1042 = vmatpush1.bf16.msra.mxu0 0
        %1043 = vmatprep.subr.bf16.mxu0 0
        %1044 = vmatpush1.bf16.msra.mxu0 0
        %1045 = vmatprep.subr.bf16.mxu0 0
        %1046 = vmatpush1.bf16.msra.mxu0 0
        %1047 = vmatprep.subr.bf16.mxu0 0
        %1048 = vmatpush1.bf16.msra.mxu0 0
        %1049 = vmatprep.subr.bf16.mxu0 0
        %1050 = vmatpush1.bf16.msra.mxu0 0
        %1051 = vmatprep.mubr.bf16.mxu0 0
        %1052 = vmatmul.mubr.bf16.gmra.mrb[0].mxu0 %v646
        %v1053 = vpop.f32.mrb[0].mxu0
        %v1054 = vadd.f32 %v957, %v1053
        %v1055 = vpop.f32.mrb[0].mxu0
        %v1056 = vpop.f32.mrb[0].mxu0
        %v1057 = vadd.f32 %v960, %v1056
        %v1058 = vpop.f32.mrb[0].mxu0
        %1059 = vmatprep.mubr.bf16.mxu0 0
        %1060 = vmatmul.mubr.bf16.gmra.mrb[0].mxu0 %v649
        %v1061 = vpop.f32.mrb[0].mxu0
        %v1062 = vadd.f32 %v965, %v1061
        %v1063 = vpop.f32.mrb[0].mxu0
        %v1064 = vpop.f32.mrb[0].mxu0
        %v1065 = vadd.f32 %v968, %v1064
        %v1066 = vpop.f32.mrb[0].mxu0
        %1067 = vmatprep.mubr.bf16.mxu0 0
        %1068 = vmatmul.mubr.bf16.gmra.mrb[0].mxu0 %v652
        %v1069 = vpop.f32.mrb[0].mxu0
        %v1070 = vadd.f32 %v973, %v1069
        %v1071 = vpop.f32.mrb[0].mxu0
        %v1072 = vpop.f32.mrb[0].mxu0
        %v1073 = vadd.f32 %v976, %v1072
        %v1074 = vpop.f32.mrb[0].mxu0
        %1075 = vmatprep.mubr.bf16.mxu0 0
        %1076 = vmatmul.mubr.bf16.gmra.mrb[0].mxu0 %v655
        %v1077 = vpop.f32.mrb[0].mxu0
        %v1078 = vadd.f32 %v981, %v1077
        %v1079 = vpop.f32.mrb[0].mxu0
        %v1080 = vpop.f32.mrb[0].mxu0
        %v1081 = vadd.f32 %v984, %v1080
        %v1082 = vpop.f32.mrb[0].mxu0
        %1083 = vmatprep.mubr.bf16.mxu0 0
        %1084 = vmatmul.mubr.bf16.gmra.mrb[0].mxu0 %v658
        %v1085 = vpop.f32.mrb[0].mxu0
        %v1086 = vadd.f32 %v989, %v1085
        %v1087 = vpop.f32.mrb[0].mxu0
        %v1088 = vpop.f32.mrb[0].mxu0
        %v1089 = vadd.f32 %v992, %v1088
        %v1090 = vpop.f32.mrb[0].mxu0
        %1091 = vmatprep.mubr.bf16.mxu0 0
        %1092 = vmatmul.mubr.bf16.gmra.mrb[0].mxu0 %v661
        %v1093 = vpop.f32.mrb[0].mxu0
        %v1094 = vadd.f32 %v997, %v1093
        %v1095 = vpop.f32.mrb[0].mxu0
        %v1096 = vpop.f32.mrb[0].mxu0
        %v1097 = vadd.f32 %v1000, %v1096
        %v1098 = vpop.f32.mrb[0].mxu0
        %1099 = vmatprep.mubr.bf16.mxu0 0
        %1100 = vmatmul.mubr.bf16.gmra.mrb[0].mxu0 %v664
        %v1101 = vpop.f32.mrb[0].mxu0
        %v1102 = vadd.f32 %v1005, %v1101
        %v1103 = vpop.f32.mrb[0].mxu0
        %v1104 = vpop.f32.mrb[0].mxu0
        %v1105 = vadd.f32 %v1008, %v1104
        %v1106 = vpop.f32.mrb[0].mxu0
        %1107 = vmatprep.mubr.bf16.mxu0 0
        %1108 = vmatmul.mubr.bf16.gmra.mrb[0].mxu0 %v667
        %v1109 = vpop.f32.mrb[0].mxu0
        %v1110 = vadd.f32 %v1013, %v1109
        %v1111 = vpop.f32.mrb[0].mxu0
        %v1112 = vpop.f32.mrb[0].mxu0
        %v1113 = vadd.f32 %v1016, %v1112
        %v1114 = vpop.f32.mrb[0].mxu0
        %1115 = vdwg.mxu0
        %v1116 = vld [vmem:[%s221 + $0x80] sm:$0xf]
        %v1117 = vld [vmem:[%s221 + $0x84] sm:$0xf]
        %v1118 = vld [vmem:[%s221 + $0x88] sm:$0xf]
        %v1119 = vld [vmem:[%s221 + $0x8c] sm:$0xf]
        %v1120 = vld [vmem:[%s221 + $0x90] sm:$0xf]
        %v1121 = vld [vmem:[%s221 + $0x94] sm:$0xf]
        %v1122 = vld [vmem:[%s221 + $0x98] sm:$0xf]
        %v1123 = vld [vmem:[%s221 + $0x9c] sm:$0xf]
        %v1124 = vld [vmem:[%s221 + $0xa0] sm:$0xf]
        %v1125 = vld [vmem:[%s221 + $0xa4] sm:$0xf]
        %v1126 = vld [vmem:[%s221 + $0xa8] sm:$0xf]
        %v1127 = vld [vmem:[%s221 + $0xac] sm:$0xf]
        %v1128 = vld [vmem:[%s221 + $0xb0] sm:$0xf]
        %v1129 = vld [vmem:[%s221 + $0xb4] sm:$0xf]
        %v1130 = vld [vmem:[%s221 + $0xb8] sm:$0xf]
        %v1131 = vld [vmem:[%s221 + $0xbc] sm:$0xf]
        %v1148 = vunpack.c.l.b16 %v1116
        %v1149 = vunpack.c.l.b16 %v1117
        %v1150 = vunpack.c.l.b16 %v1118
        %v1151 = vunpack.c.l.b16 %v1119
        %v1152 = vunpack.c.l.b16 %v1120
        %v1153 = vunpack.c.l.b16 %v1121
        %v1154 = vunpack.c.l.b16 %v1122
        %v1155 = vunpack.c.l.b16 %v1123
        %v1156 = vunpack.c.l.b16 %v1124
        %v1157 = vunpack.c.l.b16 %v1125
        %v1158 = vunpack.c.l.b16 %v1126
        %v1159 = vunpack.c.l.b16 %v1127
        %v1160 = vunpack.c.l.b16 %v1128
        %v1161 = vunpack.c.l.b16 %v1129
        %v1162 = vunpack.c.l.b16 %v1130
        %v1163 = vunpack.c.l.b16 %v1131
        %v1164 = vpack.c.b16 %v1149, %v1148
        %v1165 = vpack.c.b16 %v1151, %v1150
        %v1166 = vpack.c.b16 %v1153, %v1152
        %v1167 = vpack.c.b16 %v1155, %v1154
        %v1168 = vpack.c.b16 %v1157, %v1156
        %v1169 = vpack.c.b16 %v1159, %v1158
        %v1170 = vpack.c.b16 %v1161, %v1160
        %v1171 = vpack.c.b16 %v1163, %v1162
        %v1173 = vsel %vm309, %v1164, 0
        %v1176 = vsel %vm309, %v1165, 0
        %v1179 = vsel %vm309, %v1166, 0
        %v1182 = vsel %vm309, %v1167, 0
        %v1185 = vsel %vm309, %v1168, 0
        %v1188 = vsel %vm309, %v1169, 0
        %v1191 = vsel %vm309, %v1170, 0
        %v1194 = vsel %vm309, %v1171, 0
        %1196 = vmatprep.subr.bf16.mxu0 0
        %1197 = vmatpush1.bf16.msra.mxu0 %v641
        %1198 = vmatprep.subr.bf16.mxu0 0
        %1199 = vmatpush1.bf16.msra.mxu0 %v642
        %1200 = vmatprep.subr.bf16.mxu0 0
        %1201 = vmatpush1.bf16.msra.mxu0 0
        %1202 = vmatprep.subr.bf16.mxu0 0
        %1203 = vmatpush1.bf16.msra.mxu0 0
        %1204 = vmatprep.subr.bf16.mxu0 0
        %1205 = vmatpush1.bf16.msra.mxu0 0
        %1206 = vmatprep.subr.bf16.mxu0 0
        %1207 = vmatpush1.bf16.msra.mxu0 0
        %1208 = vmatprep.subr.bf16.mxu0 0
        %1209 = vmatpush1.bf16.msra.mxu0 0
        %1210 = vmatprep.subr.bf16.mxu0 0
        %1211 = vmatpush1.bf16.msra.mxu0 0
        %1212 = vmatprep.subr.bf16.mxu0 0
        %1213 = vmatpush1.bf16.msra.mxu0 0
        %1214 = vmatprep.subr.bf16.mxu0 0
        %1215 = vmatpush1.bf16.msra.mxu0 0
        %1216 = vmatprep.subr.bf16.mxu0 0
        %1217 = vmatpush1.bf16.msra.mxu0 0
        %1218 = vmatprep.subr.bf16.mxu0 0
        %1219 = vmatpush1.bf16.msra.mxu0 0
        %1220 = vmatprep.subr.bf16.mxu0 0
        %1221 = vmatpush1.bf16.msra.mxu0 0
        %1222 = vmatprep.subr.bf16.mxu0 0
        %1223 = vmatpush1.bf16.msra.mxu0 0
        %1224 = vmatprep.subr.bf16.mxu0 0
        %1225 = vmatpush1.bf16.msra.mxu0 0
        %1226 = vmatprep.subr.bf16.mxu0 0
        %1227 = vmatpush1.bf16.msra.mxu0 0
        %1228 = vmatprep.mubr.bf16.mxu0 0
        %1229 = vmatmul.mubr.bf16.gmra.mrb[0].mxu0 %v1173
        %v1230 = vpop.f32.mrb[0].mxu0
        %v1231 = vadd.f32 0.0, %v1230
        %v1232 = vpop.f32.mrb[0].mxu0
        %v1233 = vpop.f32.mrb[0].mxu0
        %v1234 = vadd.f32 0.0, %v1233
        %v1235 = vpop.f32.mrb[0].mxu0
        %1236 = vmatprep.mubr.bf16.mxu0 0
        %1237 = vmatmul.mubr.bf16.gmra.mrb[0].mxu0 %v1176
        %v1238 = vpop.f32.mrb[0].mxu0
        %v1239 = vadd.f32 0.0, %v1238
        %v1240 = vpop.f32.mrb[0].mxu0
        %v1241 = vpop.f32.mrb[0].mxu0
        %v1242 = vadd.f32 0.0, %v1241
        %v1243 = vpop.f32.mrb[0].mxu0
        %1244 = vmatprep.mubr.bf16.mxu0 0
        %1245 = vmatmul.mubr.bf16.gmra.mrb[0].mxu0 %v1179
        %v1246 = vpop.f32.mrb[0].mxu0
        %v1247 = vadd.f32 0.0, %v1246
        %v1248 = vpop.f32.mrb[0].mxu0
        %v1249 = vpop.f32.mrb[0].mxu0
        %v1250 = vadd.f32 0.0, %v1249
        %v1251 = vpop.f32.mrb[0].mxu0
        %1252 = vmatprep.mubr.bf16.mxu0 0
        %1253 = vmatmul.mubr.bf16.gmra.mrb[0].mxu0 %v1182
        %v1254 = vpop.f32.mrb[0].mxu0
        %v1255 = vadd.f32 0.0, %v1254
        %v1256 = vpop.f32.mrb[0].mxu0
        %v1257 = vpop.f32.mrb[0].mxu0
        %v1258 = vadd.f32 0.0, %v1257
        %v1259 = vpop.f32.mrb[0].mxu0
        %1260 = vmatprep.mubr.bf16.mxu0 0
        %1261 = vmatmul.mubr.bf16.gmra.mrb[0].mxu0 %v1185
        %v1262 = vpop.f32.mrb[0].mxu0
        %v1263 = vadd.f32 0.0, %v1262
        %v1264 = vpop.f32.mrb[0].mxu0
        %v1265 = vpop.f32.mrb[0].mxu0
        %v1266 = vadd.f32 0.0, %v1265
        %v1267 = vpop.f32.mrb[0].mxu0
        %1268 = vmatprep.mubr.bf16.mxu0 0
        %1269 = vmatmul.mubr.bf16.gmra.mrb[0].mxu0 %v1188
        %v1270 = vpop.f32.mrb[0].mxu0
        %v1271 = vadd.f32 0.0, %v1270
        %v1272 = vpop.f32.mrb[0].mxu0
        %v1273 = vpop.f32.mrb[0].mxu0
        %v1274 = vadd.f32 0.0, %v1273
        %v1275 = vpop.f32.mrb[0].mxu0
        %1276 = vmatprep.mubr.bf16.mxu0 0
        %1277 = vmatmul.mubr.bf16.gmra.mrb[0].mxu0 %v1191
        %v1278 = vpop.f32.mrb[0].mxu0
        %v1279 = vadd.f32 0.0, %v1278
        %v1280 = vpop.f32.mrb[0].mxu0
        %v1281 = vpop.f32.mrb[0].mxu0
        %v1282 = vadd.f32 0.0, %v1281
        %v1283 = vpop.f32.mrb[0].mxu0
        %1284 = vmatprep.mubr.bf16.mxu0 0
        %1285 = vmatmul.mubr.bf16.gmra.mrb[0].mxu0 %v1194
        %v1286 = vpop.f32.mrb[0].mxu0
        %v1287 = vadd.f32 0.0, %v1286
        %v1288 = vpop.f32.mrb[0].mxu0
        %v1289 = vpop.f32.mrb[0].mxu0
        %v1290 = vadd.f32 0.0, %v1289
        %v1291 = vpop.f32.mrb[0].mxu0
        %1292 = vdwg.mxu0
        %v1293 = vadd.f32 %v1054, %v1231
        %v1294 = vadd.f32 %v1057, %v1234
        %v1295 = vadd.f32 %v1062, %v1239
        %v1296 = vadd.f32 %v1065, %v1242
        %v1297 = vadd.f32 %v1070, %v1247
        %v1298 = vadd.f32 %v1073, %v1250
        %v1299 = vadd.f32 %v1078, %v1255
        %v1300 = vadd.f32 %v1081, %v1258
        %v1301 = vadd.f32 %v1086, %v1263
        %v1302 = vadd.f32 %v1089, %v1266
        %v1303 = vadd.f32 %v1094, %v1271
        %v1304 = vadd.f32 %v1097, %v1274
        %v1305 = vadd.f32 %v1102, %v1279
        %v1306 = vadd.f32 %v1105, %v1282
        %v1307 = vadd.f32 %v1110, %v1287
        %v1308 = vadd.f32 %v1113, %v1290
        %v1309 = vadd.f32 %v1293, %v786
        %v1310 = vadd.f32 %v1294, %v786
        %v1311 = vadd.f32 %v1295, %v786
        %v1312 = vadd.f32 %v1296, %v786
        %v1313 = vadd.f32 %v1297, %v786
        %v1314 = vadd.f32 %v1298, %v786
        %v1315 = vadd.f32 %v1299, %v786
        %v1316 = vadd.f32 %v1300, %v786
        %v1317 = vadd.f32 %v1301, %v786
        %v1318 = vadd.f32 %v1302, %v786
        %v1319 = vadd.f32 %v1303, %v786
        %v1320 = vadd.f32 %v1304, %v786
        %v1321 = vadd.f32 %v1305, %v786
        %v1322 = vadd.f32 %v1306, %v786
        %v1323 = vadd.f32 %v1307, %v786
        %v1324 = vadd.f32 %v1308, %v786
        %v1325 = vmax.f32 %v1309, 0.0
        %v1326 = vmax.f32 %v1310, 0.0
        %v1327 = vmax.f32 %v1311, 0.0
        %v1328 = vmax.f32 %v1312, 0.0
        %v1329 = vmax.f32 %v1313, 0.0
        %v1330 = vmax.f32 %v1314, 0.0
        %v1331 = vmax.f32 %v1315, 0.0
        %v1332 = vmax.f32 %v1316, 0.0
        %v1333 = vmax.f32 %v1317, 0.0
        %v1334 = vmax.f32 %v1318, 0.0
        %v1335 = vmax.f32 %v1319, 0.0
        %v1336 = vmax.f32 %v1320, 0.0
        %v1337 = vmax.f32 %v1321, 0.0
        %v1338 = vmax.f32 %v1322, 0.0
        %v1339 = vmax.f32 %v1323, 0.0
        %v1340 = vmax.f32 %v1324, 0.0
        %v1341 = vadd.f32 %v1325, %v1326
        %v1342 = vadd.f32 %v1341, %v1327
        %v1343 = vadd.f32 %v1342, %v1328
        %v1344 = vadd.f32 %v1343, %v1329
        %v1345 = vadd.f32 %v1344, %v1330
        %v1346 = vadd.f32 %v1345, %v1331
        %v1347 = vadd.f32 %v1346, %v1332
        %v1348 = vadd.f32 %v1347, %v1333
        %v1349 = vadd.f32 %v1348, %v1334
        %v1350 = vadd.f32 %v1349, %v1335
        %v1351 = vadd.f32 %v1350, %v1336
        %v1352 = vadd.f32 %v1351, %v1337
        %v1353 = vadd.f32 %v1352, %v1338
        %v1354 = vadd.f32 %v1353, %v1339
        %v1355 = vadd.f32 %v1354, %v1340
        %v1356 = vrot.slane %v1355, 4
        %v1357 = vadd.f32 %v1355, %v1356
        %v1358 = vrot.slane %v1357, 2
        %v1359 = vadd.f32 %v1357, %v1358
        %v1360 = vrot.slane %v1359, 1
        %v1361 = vadd.f32 %v1359, %v1360
        %v1362 = vadd.f32 %v841, %v1361
        %v1363 = vld [vmem:[%s221 + $0xa0] sm:$0xf]
        %v1364 = vld [vmem:[%s221 + $0xa4] sm:$0xf]
        %v1365 = vld [vmem:[%s221 + $0xa8] sm:$0xf]
        %v1366 = vld [vmem:[%s221 + $0xac] sm:$0xf]
        %v1367 = vld [vmem:[%s221 + $0xb0] sm:$0xf]
        %v1368 = vld [vmem:[%s221 + $0xb4] sm:$0xf]
        %v1369 = vld [vmem:[%s221 + $0xb8] sm:$0xf]
        %v1370 = vld [vmem:[%s221 + $0xbc] sm:$0xf]
        %v1371 = vld [vmem:[%s221 + $0xc0] sm:$0xf]
        %v1372 = vld [vmem:[%s221 + $0xc4] sm:$0xf]
        %v1373 = vld [vmem:[%s221 + $0xc8] sm:$0xf]
        %v1374 = vld [vmem:[%s221 + $0xcc] sm:$0xf]
        %v1375 = vld [vmem:[%s221 + $0xd0] sm:$0xf]
        %v1376 = vld [vmem:[%s221 + $0xd4] sm:$0xf]
        %v1377 = vld [vmem:[%s221 + $0xd8] sm:$0xf]
        %v1378 = vld [vmem:[%s221 + $0xdc] sm:$0xf]
        %v1395 = vunpack.c.l.b16 %v1363
        %v1396 = vunpack.c.l.b16 %v1364
        %v1397 = vunpack.c.l.b16 %v1365
        %v1398 = vunpack.c.l.b16 %v1366
        %v1399 = vunpack.c.l.b16 %v1367
        %v1400 = vunpack.c.l.b16 %v1368
        %v1401 = vunpack.c.l.b16 %v1369
        %v1402 = vunpack.c.l.b16 %v1370
        %v1403 = vunpack.c.l.b16 %v1371
        %v1404 = vunpack.c.l.b16 %v1372
        %v1405 = vunpack.c.l.b16 %v1373
        %v1406 = vunpack.c.l.b16 %v1374
        %v1407 = vunpack.c.l.b16 %v1375
        %v1408 = vunpack.c.l.b16 %v1376
        %v1409 = vunpack.c.l.b16 %v1377
        %v1410 = vunpack.c.l.b16 %v1378
        %v1411 = vpack.c.b16 %v1396, %v1395
        %v1412 = vpack.c.b16 %v1398, %v1397
        %v1413 = vpack.c.b16 %v1400, %v1399
        %v1414 = vpack.c.b16 %v1402, %v1401
        %v1415 = vpack.c.b16 %v1404, %v1403
        %v1416 = vpack.c.b16 %v1406, %v1405
        %v1417 = vpack.c.b16 %v1408, %v1407
        %v1418 = vpack.c.b16 %v1410, %v1409
        %v1420 = vsel %vm309, %v1411, 0
        %v1423 = vsel %vm309, %v1412, 0
        %v1426 = vsel %vm309, %v1413, 0
        %v1429 = vsel %vm309, %v1414, 0
        %v1432 = vsel %vm309, %v1415, 0
        %v1435 = vsel %vm309, %v1416, 0
        %v1438 = vsel %vm309, %v1417, 0
        %v1441 = vsel %vm309, %v1418, 0
        %1443 = vmatprep.subr.bf16.mxu0 0
        %1444 = vmatpush1.bf16.msra.mxu0 %v305
        %1445 = vmatprep.subr.bf16.mxu0 0
        %1446 = vmatpush1.bf16.msra.mxu0 %v306
        %1447 = vmatprep.subr.bf16.mxu0 0
        %1448 = vmatpush1.bf16.msra.mxu0 0
        %1449 = vmatprep.subr.bf16.mxu0 0
        %1450 = vmatpush1.bf16.msra.mxu0 0
        %1451 = vmatprep.subr.bf16.mxu0 0
        %1452 = vmatpush1.bf16.msra.mxu0 0
        %1453 = vmatprep.subr.bf16.mxu0 0
        %1454 = vmatpush1.bf16.msra.mxu0 0
        %1455 = vmatprep.subr.bf16.mxu0 0
        %1456 = vmatpush1.bf16.msra.mxu0 0
        %1457 = vmatprep.subr.bf16.mxu0 0
        %1458 = vmatpush1.bf16.msra.mxu0 0
        %1459 = vmatprep.subr.bf16.mxu0 0
        %1460 = vmatpush1.bf16.msra.mxu0 0
        %1461 = vmatprep.subr.bf16.mxu0 0
        %1462 = vmatpush1.bf16.msra.mxu0 0
        %1463 = vmatprep.subr.bf16.mxu0 0
        %1464 = vmatpush1.bf16.msra.mxu0 0
        %1465 = vmatprep.subr.bf16.mxu0 0
        %1466 = vmatpush1.bf16.msra.mxu0 0
        %1467 = vmatprep.subr.bf16.mxu0 0
        %1468 = vmatpush1.bf16.msra.mxu0 0
        %1469 = vmatprep.subr.bf16.mxu0 0
        %1470 = vmatpush1.bf16.msra.mxu0 0
        %1471 = vmatprep.subr.bf16.mxu0 0
        %1472 = vmatpush1.bf16.msra.mxu0 0
        %1473 = vmatprep.subr.bf16.mxu0 0
        %1474 = vmatpush1.bf16.msra.mxu0 0
        %1475 = vmatprep.mubr.bf16.mxu0 0
        %1476 = vmatmul.mubr.bf16.gmra.mrb[0].mxu0 %v1420
        %v1477 = vpop.f32.mrb[0].mxu0
        %v1478 = vadd.f32 0.0, %v1477
        %v1479 = vpop.f32.mrb[0].mxu0
        %v1480 = vpop.f32.mrb[0].mxu0
        %v1481 = vadd.f32 0.0, %v1480
        %v1482 = vpop.f32.mrb[0].mxu0
        %1483 = vmatprep.mubr.bf16.mxu0 0
        %1484 = vmatmul.mubr.bf16.gmra.mrb[0].mxu0 %v1423
        %v1485 = vpop.f32.mrb[0].mxu0
        %v1486 = vadd.f32 0.0, %v1485
        %v1487 = vpop.f32.mrb[0].mxu0
        %v1488 = vpop.f32.mrb[0].mxu0
        %v1489 = vadd.f32 0.0, %v1488
        %v1490 = vpop.f32.mrb[0].mxu0
        %1491 = vmatprep.mubr.bf16.mxu0 0
        %1492 = vmatmul.mubr.bf16.gmra.mrb[0].mxu0 %v1426
        %v1493 = vpop.f32.mrb[0].mxu0
        %v1494 = vadd.f32 0.0, %v1493
        %v1495 = vpop.f32.mrb[0].mxu0
        %v1496 = vpop.f32.mrb[0].mxu0
        %v1497 = vadd.f32 0.0, %v1496
        %v1498 = vpop.f32.mrb[0].mxu0
        %1499 = vmatprep.mubr.bf16.mxu0 0
        %1500 = vmatmul.mubr.bf16.gmra.mrb[0].mxu0 %v1429
        %v1501 = vpop.f32.mrb[0].mxu0
        %v1502 = vadd.f32 0.0, %v1501
        %v1503 = vpop.f32.mrb[0].mxu0
        %v1504 = vpop.f32.mrb[0].mxu0
        %v1505 = vadd.f32 0.0, %v1504
        %v1506 = vpop.f32.mrb[0].mxu0
        %1507 = vmatprep.mubr.bf16.mxu0 0
        %1508 = vmatmul.mubr.bf16.gmra.mrb[0].mxu0 %v1432
        %v1509 = vpop.f32.mrb[0].mxu0
        %v1510 = vadd.f32 0.0, %v1509
        %v1511 = vpop.f32.mrb[0].mxu0
        %v1512 = vpop.f32.mrb[0].mxu0
        %v1513 = vadd.f32 0.0, %v1512
        %v1514 = vpop.f32.mrb[0].mxu0
        %1515 = vmatprep.mubr.bf16.mxu0 0
        %1516 = vmatmul.mubr.bf16.gmra.mrb[0].mxu0 %v1435
        %v1517 = vpop.f32.mrb[0].mxu0
        %v1518 = vadd.f32 0.0, %v1517
        %v1519 = vpop.f32.mrb[0].mxu0
        %v1520 = vpop.f32.mrb[0].mxu0
        %v1521 = vadd.f32 0.0, %v1520
        %v1522 = vpop.f32.mrb[0].mxu0
        %1523 = vmatprep.mubr.bf16.mxu0 0
        %1524 = vmatmul.mubr.bf16.gmra.mrb[0].mxu0 %v1438
        %v1525 = vpop.f32.mrb[0].mxu0
        %v1526 = vadd.f32 0.0, %v1525
        %v1527 = vpop.f32.mrb[0].mxu0
        %v1528 = vpop.f32.mrb[0].mxu0
        %v1529 = vadd.f32 0.0, %v1528
        %v1530 = vpop.f32.mrb[0].mxu0
        %1531 = vmatprep.mubr.bf16.mxu0 0
        %1532 = vmatmul.mubr.bf16.gmra.mrb[0].mxu0 %v1441
        %v1533 = vpop.f32.mrb[0].mxu0
        %v1534 = vadd.f32 0.0, %v1533
        %v1535 = vpop.f32.mrb[0].mxu0
        %v1536 = vpop.f32.mrb[0].mxu0
        %v1537 = vadd.f32 0.0, %v1536
        %v1538 = vpop.f32.mrb[0].mxu0
        %1539 = vdwg.mxu0
        %1540 = vmatprep.subr.bf16.mxu0 0
        %1541 = vmatpush1.bf16.msra.mxu0 %v459
        %1542 = vmatprep.subr.bf16.mxu0 0
        %1543 = vmatpush1.bf16.msra.mxu0 %v460
        %1544 = vmatprep.subr.bf16.mxu0 0
        %1545 = vmatpush1.bf16.msra.mxu0 0
        %1546 = vmatprep.subr.bf16.mxu0 0
        %1547 = vmatpush1.bf16.msra.mxu0 0
        %1548 = vmatprep.subr.bf16.mxu0 0
        %1549 = vmatpush1.bf16.msra.mxu0 0
        %1550 = vmatprep.subr.bf16.mxu0 0
        %1551 = vmatpush1.bf16.msra.mxu0 0
        %1552 = vmatprep.subr.bf16.mxu0 0
        %1553 = vmatpush1.bf16.msra.mxu0 0
        %1554 = vmatprep.subr.bf16.mxu0 0
        %1555 = vmatpush1.bf16.msra.mxu0 0
        %1556 = vmatprep.subr.bf16.mxu0 0
        %1557 = vmatpush1.bf16.msra.mxu0 0
        %1558 = vmatprep.subr.bf16.mxu0 0
        %1559 = vmatpush1.bf16.msra.mxu0 0
        %1560 = vmatprep.subr.bf16.mxu0 0
        %1561 = vmatpush1.bf16.msra.mxu0 0
        %1562 = vmatprep.subr.bf16.mxu0 0
        %1563 = vmatpush1.bf16.msra.mxu0 0
        %1564 = vmatprep.subr.bf16.mxu0 0
        %1565 = vmatpush1.bf16.msra.mxu0 0
        %1566 = vmatprep.subr.bf16.mxu0 0
        %1567 = vmatpush1.bf16.msra.mxu0 0
        %1568 = vmatprep.subr.bf16.mxu0 0
        %1569 = vmatpush1.bf16.msra.mxu0 0
        %1570 = vmatprep.subr.bf16.mxu0 0
        %1571 = vmatpush1.bf16.msra.mxu0 0
        %1572 = vmatprep.mubr.bf16.mxu0 0
        %1573 = vmatmul.mubr.bf16.gmra.mrb[0].mxu0 %v1173
        %v1574 = vpop.f32.mrb[0].mxu0
        %v1575 = vadd.f32 %v1478, %v1574
        %v1576 = vpop.f32.mrb[0].mxu0
        %v1577 = vpop.f32.mrb[0].mxu0
        %v1578 = vadd.f32 %v1481, %v1577
        %v1579 = vpop.f32.mrb[0].mxu0
        %1580 = vmatprep.mubr.bf16.mxu0 0
        %1581 = vmatmul.mubr.bf16.gmra.mrb[0].mxu0 %v1176
        %v1582 = vpop.f32.mrb[0].mxu0
        %v1583 = vadd.f32 %v1486, %v1582
        %v1584 = vpop.f32.mrb[0].mxu0
        %v1585 = vpop.f32.mrb[0].mxu0
        %v1586 = vadd.f32 %v1489, %v1585
        %v1587 = vpop.f32.mrb[0].mxu0
        %1588 = vmatprep.mubr.bf16.mxu0 0
        %1589 = vmatmul.mubr.bf16.gmra.mrb[0].mxu0 %v1179
        %v1590 = vpop.f32.mrb[0].mxu0
        %v1591 = vadd.f32 %v1494, %v1590
        %v1592 = vpop.f32.mrb[0].mxu0
        %v1593 = vpop.f32.mrb[0].mxu0
        %v1594 = vadd.f32 %v1497, %v1593
        %v1595 = vpop.f32.mrb[0].mxu0
        %1596 = vmatprep.mubr.bf16.mxu0 0
        %1597 = vmatmul.mubr.bf16.gmra.mrb[0].mxu0 %v1182
        %v1598 = vpop.f32.mrb[0].mxu0
        %v1599 = vadd.f32 %v1502, %v1598
        %v1600 = vpop.f32.mrb[0].mxu0
        %v1601 = vpop.f32.mrb[0].mxu0
        %v1602 = vadd.f32 %v1505, %v1601
        %v1603 = vpop.f32.mrb[0].mxu0
        %1604 = vmatprep.mubr.bf16.mxu0 0
        %1605 = vmatmul.mubr.bf16.gmra.mrb[0].mxu0 %v1185
        %v1606 = vpop.f32.mrb[0].mxu0
        %v1607 = vadd.f32 %v1510, %v1606
        %v1608 = vpop.f32.mrb[0].mxu0
        %v1609 = vpop.f32.mrb[0].mxu0
        %v1610 = vadd.f32 %v1513, %v1609
        %v1611 = vpop.f32.mrb[0].mxu0
        %1612 = vmatprep.mubr.bf16.mxu0 0
        %1613 = vmatmul.mubr.bf16.gmra.mrb[0].mxu0 %v1188
        %v1614 = vpop.f32.mrb[0].mxu0
        %v1615 = vadd.f32 %v1518, %v1614
        %v1616 = vpop.f32.mrb[0].mxu0
        %v1617 = vpop.f32.mrb[0].mxu0
        %v1618 = vadd.f32 %v1521, %v1617
        %v1619 = vpop.f32.mrb[0].mxu0
        %1620 = vmatprep.mubr.bf16.mxu0 0
        %1621 = vmatmul.mubr.bf16.gmra.mrb[0].mxu0 %v1191
        %v1622 = vpop.f32.mrb[0].mxu0
        %v1623 = vadd.f32 %v1526, %v1622
        %v1624 = vpop.f32.mrb[0].mxu0
        %v1625 = vpop.f32.mrb[0].mxu0
        %v1626 = vadd.f32 %v1529, %v1625
        %v1627 = vpop.f32.mrb[0].mxu0
        %1628 = vmatprep.mubr.bf16.mxu0 0
        %1629 = vmatmul.mubr.bf16.gmra.mrb[0].mxu0 %v1194
        %v1630 = vpop.f32.mrb[0].mxu0
        %v1631 = vadd.f32 %v1534, %v1630
        %v1632 = vpop.f32.mrb[0].mxu0
        %v1633 = vpop.f32.mrb[0].mxu0
        %v1634 = vadd.f32 %v1537, %v1633
        %v1635 = vpop.f32.mrb[0].mxu0
        %1636 = vdwg.mxu0
        %v1637 = vld [vmem:[%s221 + $0xc0] sm:$0xf]
        %v1638 = vld [vmem:[%s221 + $0xc4] sm:$0xf]
        %v1639 = vld [vmem:[%s221 + $0xc8] sm:$0xf]
        %v1640 = vld [vmem:[%s221 + $0xcc] sm:$0xf]
        %v1641 = vld [vmem:[%s221 + $0xd0] sm:$0xf]
        %v1642 = vld [vmem:[%s221 + $0xd4] sm:$0xf]
        %v1643 = vld [vmem:[%s221 + $0xd8] sm:$0xf]
        %v1644 = vld [vmem:[%s221 + $0xdc] sm:$0xf]
        %v1645 = vld [vmem:[%s221 + $0xe0] sm:$0xf]
        %v1646 = vld [vmem:[%s221 + $0xe4] sm:$0xf]
        %v1647 = vld [vmem:[%s221 + $0xe8] sm:$0xf]
        %v1648 = vld [vmem:[%s221 + $0xec] sm:$0xf]
        %v1649 = vld [vmem:[%s221 + $0xf0] sm:$0xf]
        %v1650 = vld [vmem:[%s221 + $0xf4] sm:$0xf]
        %v1651 = vld [vmem:[%s221 + $0xf8] sm:$0xf]
        %v1652 = vld [vmem:[%s221 + $0xfc] sm:$0xf]
        %v1669 = vunpack.c.l.b16 %v1637
        %v1670 = vunpack.c.l.b16 %v1638
        %v1671 = vunpack.c.l.b16 %v1639
        %v1672 = vunpack.c.l.b16 %v1640
        %v1673 = vunpack.c.l.b16 %v1641
        %v1674 = vunpack.c.l.b16 %v1642
        %v1675 = vunpack.c.l.b16 %v1643
        %v1676 = vunpack.c.l.b16 %v1644
        %v1677 = vunpack.c.l.b16 %v1645
        %v1678 = vunpack.c.l.b16 %v1646
        %v1679 = vunpack.c.l.b16 %v1647
        %v1680 = vunpack.c.l.b16 %v1648
        %v1681 = vunpack.c.l.b16 %v1649
        %v1682 = vunpack.c.l.b16 %v1650
        %v1683 = vunpack.c.l.b16 %v1651
        %v1684 = vunpack.c.l.b16 %v1652
        %v1685 = vpack.c.b16 %v1670, %v1669
        %v1686 = vpack.c.b16 %v1672, %v1671
        %v1687 = vpack.c.b16 %v1674, %v1673
        %v1688 = vpack.c.b16 %v1676, %v1675
        %v1689 = vpack.c.b16 %v1678, %v1677
        %v1690 = vpack.c.b16 %v1680, %v1679
        %v1691 = vpack.c.b16 %v1682, %v1681
        %v1692 = vpack.c.b16 %v1684, %v1683
        %v1694 = vsel %vm309, %v1685, 0
        %v1697 = vsel %vm309, %v1686, 0
        %v1700 = vsel %vm309, %v1687, 0
        %v1703 = vsel %vm309, %v1688, 0
        %v1706 = vsel %vm309, %v1689, 0
        %v1709 = vsel %vm309, %v1690, 0
        %v1712 = vsel %vm309, %v1691, 0
        %v1715 = vsel %vm309, %v1692, 0
        %1717 = vmatprep.subr.bf16.mxu0 0
        %1718 = vmatpush1.bf16.msra.mxu0 %v641
        %1719 = vmatprep.subr.bf16.mxu0 0
        %1720 = vmatpush1.bf16.msra.mxu0 %v642
        %1721 = vmatprep.subr.bf16.mxu0 0
        %1722 = vmatpush1.bf16.msra.mxu0 0
        %1723 = vmatprep.subr.bf16.mxu0 0
        %1724 = vmatpush1.bf16.msra.mxu0 0
        %1725 = vmatprep.subr.bf16.mxu0 0
        %1726 = vmatpush1.bf16.msra.mxu0 0
        %1727 = vmatprep.subr.bf16.mxu0 0
        %1728 = vmatpush1.bf16.msra.mxu0 0
        %1729 = vmatprep.subr.bf16.mxu0 0
        %1730 = vmatpush1.bf16.msra.mxu0 0
        %1731 = vmatprep.subr.bf16.mxu0 0
        %1732 = vmatpush1.bf16.msra.mxu0 0
        %1733 = vmatprep.subr.bf16.mxu0 0
        %1734 = vmatpush1.bf16.msra.mxu0 0
        %1735 = vmatprep.subr.bf16.mxu0 0
        %1736 = vmatpush1.bf16.msra.mxu0 0
        %1737 = vmatprep.subr.bf16.mxu0 0
        %1738 = vmatpush1.bf16.msra.mxu0 0
        %1739 = vmatprep.subr.bf16.mxu0 0
        %1740 = vmatpush1.bf16.msra.mxu0 0
        %1741 = vmatprep.subr.bf16.mxu0 0
        %1742 = vmatpush1.bf16.msra.mxu0 0
        %1743 = vmatprep.subr.bf16.mxu0 0
        %1744 = vmatpush1.bf16.msra.mxu0 0
        %1745 = vmatprep.subr.bf16.mxu0 0
        %1746 = vmatpush1.bf16.msra.mxu0 0
        %1747 = vmatprep.subr.bf16.mxu0 0
        %1748 = vmatpush1.bf16.msra.mxu0 0
        %1749 = vmatprep.mubr.bf16.mxu0 0
        %1750 = vmatmul.mubr.bf16.gmra.mrb[0].mxu0 %v1694
        %v1751 = vpop.f32.mrb[0].mxu0
        %v1752 = vadd.f32 0.0, %v1751
        %v1753 = vpop.f32.mrb[0].mxu0
        %v1754 = vpop.f32.mrb[0].mxu0
        %v1755 = vadd.f32 0.0, %v1754
        %v1756 = vpop.f32.mrb[0].mxu0
        %1757 = vmatprep.mubr.bf16.mxu0 0
        %1758 = vmatmul.mubr.bf16.gmra.mrb[0].mxu0 %v1697
        %v1759 = vpop.f32.mrb[0].mxu0
        %v1760 = vadd.f32 0.0, %v1759
        %v1761 = vpop.f32.mrb[0].mxu0
        %v1762 = vpop.f32.mrb[0].mxu0
        %v1763 = vadd.f32 0.0, %v1762
        %v1764 = vpop.f32.mrb[0].mxu0
        %1765 = vmatprep.mubr.bf16.mxu0 0
        %1766 = vmatmul.mubr.bf16.gmra.mrb[0].mxu0 %v1700
        %v1767 = vpop.f32.mrb[0].mxu0
        %v1768 = vadd.f32 0.0, %v1767
        %v1769 = vpop.f32.mrb[0].mxu0
        %v1770 = vpop.f32.mrb[0].mxu0
        %v1771 = vadd.f32 0.0, %v1770
        %v1772 = vpop.f32.mrb[0].mxu0
        %1773 = vmatprep.mubr.bf16.mxu0 0
        %1774 = vmatmul.mubr.bf16.gmra.mrb[0].mxu0 %v1703
        %v1775 = vpop.f32.mrb[0].mxu0
        %v1776 = vadd.f32 0.0, %v1775
        %v1777 = vpop.f32.mrb[0].mxu0
        %v1778 = vpop.f32.mrb[0].mxu0
        %v1779 = vadd.f32 0.0, %v1778
        %v1780 = vpop.f32.mrb[0].mxu0
        %1781 = vmatprep.mubr.bf16.mxu0 0
        %1782 = vmatmul.mubr.bf16.gmra.mrb[0].mxu0 %v1706
        %v1783 = vpop.f32.mrb[0].mxu0
        %v1784 = vadd.f32 0.0, %v1783
        %v1785 = vpop.f32.mrb[0].mxu0
        %v1786 = vpop.f32.mrb[0].mxu0
        %v1787 = vadd.f32 0.0, %v1786
        %v1788 = vpop.f32.mrb[0].mxu0
        %1789 = vmatprep.mubr.bf16.mxu0 0
        %1790 = vmatmul.mubr.bf16.gmra.mrb[0].mxu0 %v1709
        %v1791 = vpop.f32.mrb[0].mxu0
        %v1792 = vadd.f32 0.0, %v1791
        %v1793 = vpop.f32.mrb[0].mxu0
        %v1794 = vpop.f32.mrb[0].mxu0
        %v1795 = vadd.f32 0.0, %v1794
        %v1796 = vpop.f32.mrb[0].mxu0
        %1797 = vmatprep.mubr.bf16.mxu0 0
        %1798 = vmatmul.mubr.bf16.gmra.mrb[0].mxu0 %v1712
        %v1799 = vpop.f32.mrb[0].mxu0
        %v1800 = vadd.f32 0.0, %v1799
        %v1801 = vpop.f32.mrb[0].mxu0
        %v1802 = vpop.f32.mrb[0].mxu0
        %v1803 = vadd.f32 0.0, %v1802
        %v1804 = vpop.f32.mrb[0].mxu0
        %1805 = vmatprep.mubr.bf16.mxu0 0
        %1806 = vmatmul.mubr.bf16.gmra.mrb[0].mxu0 %v1715
        %v1807 = vpop.f32.mrb[0].mxu0
        %v1808 = vadd.f32 0.0, %v1807
        %v1809 = vpop.f32.mrb[0].mxu0
        %v1810 = vpop.f32.mrb[0].mxu0
        %v1811 = vadd.f32 0.0, %v1810
        %v1812 = vpop.f32.mrb[0].mxu0
        %1813 = vdwg.mxu0
        %v1814 = vadd.f32 %v1575, %v1752
        %v1815 = vadd.f32 %v1578, %v1755
        %v1816 = vadd.f32 %v1583, %v1760
        %v1817 = vadd.f32 %v1586, %v1763
        %v1818 = vadd.f32 %v1591, %v1768
        %v1819 = vadd.f32 %v1594, %v1771
        %v1820 = vadd.f32 %v1599, %v1776
        %v1821 = vadd.f32 %v1602, %v1779
        %v1822 = vadd.f32 %v1607, %v1784
        %v1823 = vadd.f32 %v1610, %v1787
        %v1824 = vadd.f32 %v1615, %v1792
        %v1825 = vadd.f32 %v1618, %v1795
        %v1826 = vadd.f32 %v1623, %v1800
        %v1827 = vadd.f32 %v1626, %v1803
        %v1828 = vadd.f32 %v1631, %v1808
        %v1829 = vadd.f32 %v1634, %v1811
        %v1830 = vadd.f32 %v1814, %v786
        %v1831 = vadd.f32 %v1815, %v786
        %v1832 = vadd.f32 %v1816, %v786
        %v1833 = vadd.f32 %v1817, %v786
        %v1834 = vadd.f32 %v1818, %v786
        %v1835 = vadd.f32 %v1819, %v786
        %v1836 = vadd.f32 %v1820, %v786
        %v1837 = vadd.f32 %v1821, %v786
        %v1838 = vadd.f32 %v1822, %v786
        %v1839 = vadd.f32 %v1823, %v786
        %v1840 = vadd.f32 %v1824, %v786
        %v1841 = vadd.f32 %v1825, %v786
        %v1842 = vadd.f32 %v1826, %v786
        %v1843 = vadd.f32 %v1827, %v786
        %v1844 = vadd.f32 %v1828, %v786
        %v1845 = vadd.f32 %v1829, %v786
        %v1846 = vmax.f32 %v1830, 0.0
        %v1847 = vmax.f32 %v1831, 0.0
        %v1848 = vmax.f32 %v1832, 0.0
        %v1849 = vmax.f32 %v1833, 0.0
        %v1850 = vmax.f32 %v1834, 0.0
        %v1851 = vmax.f32 %v1835, 0.0
        %v1852 = vmax.f32 %v1836, 0.0
        %v1853 = vmax.f32 %v1837, 0.0
        %v1854 = vmax.f32 %v1838, 0.0
        %v1855 = vmax.f32 %v1839, 0.0
        %v1856 = vmax.f32 %v1840, 0.0
        %v1857 = vmax.f32 %v1841, 0.0
        %v1858 = vmax.f32 %v1842, 0.0
        %v1859 = vmax.f32 %v1843, 0.0
        %v1860 = vmax.f32 %v1844, 0.0
        %v1861 = vmax.f32 %v1845, 0.0
        %v1862 = vadd.f32 %v1846, %v1847
        %v1863 = vadd.f32 %v1862, %v1848
        %v1864 = vadd.f32 %v1863, %v1849
        %v1865 = vadd.f32 %v1864, %v1850
        %v1866 = vadd.f32 %v1865, %v1851
        %v1867 = vadd.f32 %v1866, %v1852
        %v1868 = vadd.f32 %v1867, %v1853
        %v1869 = vadd.f32 %v1868, %v1854
        %v1870 = vadd.f32 %v1869, %v1855
        %v1871 = vadd.f32 %v1870, %v1856
        %v1872 = vadd.f32 %v1871, %v1857
        %v1873 = vadd.f32 %v1872, %v1858
        %v1874 = vadd.f32 %v1873, %v1859
        %v1875 = vadd.f32 %v1874, %v1860
        %v1876 = vadd.f32 %v1875, %v1861
        %v1877 = vrot.slane %v1876, 4
        %v1878 = vadd.f32 %v1876, %v1877
        %v1879 = vrot.slane %v1878, 2
        %v1880 = vadd.f32 %v1878, %v1879
        %v1881 = vrot.slane %v1880, 1
        %v1882 = vadd.f32 %v1880, %v1881
        %v1883 = vadd.f32 %v1362, %v1882
        %v1884 = vld [vmem:[%s221 + $0xe0] sm:$0xf]
        %v1885 = vld [vmem:[%s221 + $0xe4] sm:$0xf]
        %v1886 = vld [vmem:[%s221 + $0xe8] sm:$0xf]
        %v1887 = vld [vmem:[%s221 + $0xec] sm:$0xf]
        %v1888 = vld [vmem:[%s221 + $0xf0] sm:$0xf]
        %v1889 = vld [vmem:[%s221 + $0xf4] sm:$0xf]
        %v1890 = vld [vmem:[%s221 + $0xf8] sm:$0xf]
        %v1891 = vld [vmem:[%s221 + $0xfc] sm:$0xf]
        %v1892 = vld [vmem:[%s221 + $0x100] sm:$0xf]
        %v1893 = vld [vmem:[%s221 + $0x104] sm:$0xf]
        %v1894 = vld [vmem:[%s221 + $0x108] sm:$0xf]
        %v1895 = vld [vmem:[%s221 + $0x10c] sm:$0xf]
        %v1896 = vld [vmem:[%s221 + $0x110] sm:$0xf]
        %v1897 = vld [vmem:[%s221 + $0x114] sm:$0xf]
        %v1898 = vld [vmem:[%s221 + $0x118] sm:$0xf]
        %v1899 = vld [vmem:[%s221 + $0x11c] sm:$0xf]
        %v1916 = vunpack.c.l.b16 %v1884
        %v1917 = vunpack.c.l.b16 %v1885
        %v1918 = vunpack.c.l.b16 %v1886
        %v1919 = vunpack.c.l.b16 %v1887
        %v1920 = vunpack.c.l.b16 %v1888
        %v1921 = vunpack.c.l.b16 %v1889
        %v1922 = vunpack.c.l.b16 %v1890
        %v1923 = vunpack.c.l.b16 %v1891
        %v1924 = vunpack.c.l.b16 %v1892
        %v1925 = vunpack.c.l.b16 %v1893
        %v1926 = vunpack.c.l.b16 %v1894
        %v1927 = vunpack.c.l.b16 %v1895
        %v1928 = vunpack.c.l.b16 %v1896
        %v1929 = vunpack.c.l.b16 %v1897
        %v1930 = vunpack.c.l.b16 %v1898
        %v1931 = vunpack.c.l.b16 %v1899
        %v1932 = vpack.c.b16 %v1917, %v1916
        %v1933 = vpack.c.b16 %v1919, %v1918
        %v1934 = vpack.c.b16 %v1921, %v1920
        %v1935 = vpack.c.b16 %v1923, %v1922
        %v1936 = vpack.c.b16 %v1925, %v1924
        %v1937 = vpack.c.b16 %v1927, %v1926
        %v1938 = vpack.c.b16 %v1929, %v1928
        %v1939 = vpack.c.b16 %v1931, %v1930
        %v1941 = vsel %vm309, %v1932, 0
        %v1944 = vsel %vm309, %v1933, 0
        %v1947 = vsel %vm309, %v1934, 0
        %v1950 = vsel %vm309, %v1935, 0
        %v1953 = vsel %vm309, %v1936, 0
        %v1956 = vsel %vm309, %v1937, 0
        %v1959 = vsel %vm309, %v1938, 0
        %v1962 = vsel %vm309, %v1939, 0
        %1964 = vmatprep.subr.bf16.mxu0 0
        %1965 = vmatpush1.bf16.msra.mxu0 %v305
        %1966 = vmatprep.subr.bf16.mxu0 0
        %1967 = vmatpush1.bf16.msra.mxu0 %v306
        %1968 = vmatprep.subr.bf16.mxu0 0
        %1969 = vmatpush1.bf16.msra.mxu0 0
        %1970 = vmatprep.subr.bf16.mxu0 0
        %1971 = vmatpush1.bf16.msra.mxu0 0
        %1972 = vmatprep.subr.bf16.mxu0 0
        %1973 = vmatpush1.bf16.msra.mxu0 0
        %1974 = vmatprep.subr.bf16.mxu0 0
        %1975 = vmatpush1.bf16.msra.mxu0 0
        %1976 = vmatprep.subr.bf16.mxu0 0
        %1977 = vmatpush1.bf16.msra.mxu0 0
        %1978 = vmatprep.subr.bf16.mxu0 0
        %1979 = vmatpush1.bf16.msra.mxu0 0
        %1980 = vmatprep.subr.bf16.mxu0 0
        %1981 = vmatpush1.bf16.msra.mxu0 0
        %1982 = vmatprep.subr.bf16.mxu0 0
        %1983 = vmatpush1.bf16.msra.mxu0 0
        %1984 = vmatprep.subr.bf16.mxu0 0
        %1985 = vmatpush1.bf16.msra.mxu0 0
        %1986 = vmatprep.subr.bf16.mxu0 0
        %1987 = vmatpush1.bf16.msra.mxu0 0
        %1988 = vmatprep.subr.bf16.mxu0 0
        %1989 = vmatpush1.bf16.msra.mxu0 0
        %1990 = vmatprep.subr.bf16.mxu0 0
        %1991 = vmatpush1.bf16.msra.mxu0 0
        %1992 = vmatprep.subr.bf16.mxu0 0
        %1993 = vmatpush1.bf16.msra.mxu0 0
        %1994 = vmatprep.subr.bf16.mxu0 0
        %1995 = vmatpush1.bf16.msra.mxu0 0
        %1996 = vmatprep.mubr.bf16.mxu0 0
        %1997 = vmatmul.mubr.bf16.gmra.mrb[0].mxu0 %v1941
        %v1998 = vpop.f32.mrb[0].mxu0
        %v1999 = vadd.f32 0.0, %v1998
        %v2000 = vpop.f32.mrb[0].mxu0
        %v2001 = vpop.f32.mrb[0].mxu0
        %v2002 = vadd.f32 0.0, %v2001
        %v2003 = vpop.f32.mrb[0].mxu0
        %2004 = vmatprep.mubr.bf16.mxu0 0
        %2005 = vmatmul.mubr.bf16.gmra.mrb[0].mxu0 %v1944
        %v2006 = vpop.f32.mrb[0].mxu0
        %v2007 = vadd.f32 0.0, %v2006
        %v2008 = vpop.f32.mrb[0].mxu0
        %v2009 = vpop.f32.mrb[0].mxu0
        %v2010 = vadd.f32 0.0, %v2009
        %v2011 = vpop.f32.mrb[0].mxu0
        %2012 = vmatprep.mubr.bf16.mxu0 0
        %2013 = vmatmul.mubr.bf16.gmra.mrb[0].mxu0 %v1947
        %v2014 = vpop.f32.mrb[0].mxu0
        %v2015 = vadd.f32 0.0, %v2014
        %v2016 = vpop.f32.mrb[0].mxu0
        %v2017 = vpop.f32.mrb[0].mxu0
        %v2018 = vadd.f32 0.0, %v2017
        %v2019 = vpop.f32.mrb[0].mxu0
        %2020 = vmatprep.mubr.bf16.mxu0 0
        %2021 = vmatmul.mubr.bf16.gmra.mrb[0].mxu0 %v1950
        %v2022 = vpop.f32.mrb[0].mxu0
        %v2023 = vadd.f32 0.0, %v2022
        %v2024 = vpop.f32.mrb[0].mxu0
        %v2025 = vpop.f32.mrb[0].mxu0
        %v2026 = vadd.f32 0.0, %v2025
        %v2027 = vpop.f32.mrb[0].mxu0
        %2028 = vmatprep.mubr.bf16.mxu0 0
        %2029 = vmatmul.mubr.bf16.gmra.mrb[0].mxu0 %v1953
        %v2030 = vpop.f32.mrb[0].mxu0
        %v2031 = vadd.f32 0.0, %v2030
        %v2032 = vpop.f32.mrb[0].mxu0
        %v2033 = vpop.f32.mrb[0].mxu0
        %v2034 = vadd.f32 0.0, %v2033
        %v2035 = vpop.f32.mrb[0].mxu0
        %2036 = vmatprep.mubr.bf16.mxu0 0
        %2037 = vmatmul.mubr.bf16.gmra.mrb[0].mxu0 %v1956
        %v2038 = vpop.f32.mrb[0].mxu0
        %v2039 = vadd.f32 0.0, %v2038
        %v2040 = vpop.f32.mrb[0].mxu0
        %v2041 = vpop.f32.mrb[0].mxu0
        %v2042 = vadd.f32 0.0, %v2041
        %v2043 = vpop.f32.mrb[0].mxu0
        %2044 = vmatprep.mubr.bf16.mxu0 0
        %2045 = vmatmul.mubr.bf16.gmra.mrb[0].mxu0 %v1959
        %v2046 = vpop.f32.mrb[0].mxu0
        %v2047 = vadd.f32 0.0, %v2046
        %v2048 = vpop.f32.mrb[0].mxu0
        %v2049 = vpop.f32.mrb[0].mxu0
        %v2050 = vadd.f32 0.0, %v2049
        %v2051 = vpop.f32.mrb[0].mxu0
        %2052 = vmatprep.mubr.bf16.mxu0 0
        %2053 = vmatmul.mubr.bf16.gmra.mrb[0].mxu0 %v1962
        %v2054 = vpop.f32.mrb[0].mxu0
        %v2055 = vadd.f32 0.0, %v2054
        %v2056 = vpop.f32.mrb[0].mxu0
        %v2057 = vpop.f32.mrb[0].mxu0
        %v2058 = vadd.f32 0.0, %v2057
        %v2059 = vpop.f32.mrb[0].mxu0
        %2060 = vdwg.mxu0
        %2061 = vmatprep.subr.bf16.mxu0 0
        %2062 = vmatpush1.bf16.msra.mxu0 %v459
        %2063 = vmatprep.subr.bf16.mxu0 0
        %2064 = vmatpush1.bf16.msra.mxu0 %v460
        %2065 = vmatprep.subr.bf16.mxu0 0
        %2066 = vmatpush1.bf16.msra.mxu0 0
        %2067 = vmatprep.subr.bf16.mxu0 0
        %2068 = vmatpush1.bf16.msra.mxu0 0
        %2069 = vmatprep.subr.bf16.mxu0 0
        %2070 = vmatpush1.bf16.msra.mxu0 0
        %2071 = vmatprep.subr.bf16.mxu0 0
        %2072 = vmatpush1.bf16.msra.mxu0 0
        %2073 = vmatprep.subr.bf16.mxu0 0
        %2074 = vmatpush1.bf16.msra.mxu0 0
        %2075 = vmatprep.subr.bf16.mxu0 0
        %2076 = vmatpush1.bf16.msra.mxu0 0
        %2077 = vmatprep.subr.bf16.mxu0 0
        %2078 = vmatpush1.bf16.msra.mxu0 0
        %2079 = vmatprep.subr.bf16.mxu0 0
        %2080 = vmatpush1.bf16.msra.mxu0 0
        %2081 = vmatprep.subr.bf16.mxu0 0
        %2082 = vmatpush1.bf16.msra.mxu0 0
        %2083 = vmatprep.subr.bf16.mxu0 0
        %2084 = vmatpush1.bf16.msra.mxu0 0
        %2085 = vmatprep.subr.bf16.mxu0 0
        %2086 = vmatpush1.bf16.msra.mxu0 0
        %2087 = vmatprep.subr.bf16.mxu0 0
        %2088 = vmatpush1.bf16.msra.mxu0 0
        %2089 = vmatprep.subr.bf16.mxu0 0
        %2090 = vmatpush1.bf16.msra.mxu0 0
        %2091 = vmatprep.subr.bf16.mxu0 0
        %2092 = vmatpush1.bf16.msra.mxu0 0
        %2093 = vmatprep.mubr.bf16.mxu0 0
        %2094 = vmatmul.mubr.bf16.gmra.mrb[0].mxu0 %v1694
        %v2095 = vpop.f32.mrb[0].mxu0
        %v2096 = vadd.f32 %v1999, %v2095
        %v2097 = vpop.f32.mrb[0].mxu0
        %v2098 = vpop.f32.mrb[0].mxu0
        %v2099 = vadd.f32 %v2002, %v2098
        %v2100 = vpop.f32.mrb[0].mxu0
        %2101 = vmatprep.mubr.bf16.mxu0 0
        %2102 = vmatmul.mubr.bf16.gmra.mrb[0].mxu0 %v1697
        %v2103 = vpop.f32.mrb[0].mxu0
        %v2104 = vadd.f32 %v2007, %v2103
        %v2105 = vpop.f32.mrb[0].mxu0
        %v2106 = vpop.f32.mrb[0].mxu0
        %v2107 = vadd.f32 %v2010, %v2106
        %v2108 = vpop.f32.mrb[0].mxu0
        %2109 = vmatprep.mubr.bf16.mxu0 0
        %2110 = vmatmul.mubr.bf16.gmra.mrb[0].mxu0 %v1700
        %v2111 = vpop.f32.mrb[0].mxu0
        %v2112 = vadd.f32 %v2015, %v2111
        %v2113 = vpop.f32.mrb[0].mxu0
        %v2114 = vpop.f32.mrb[0].mxu0
        %v2115 = vadd.f32 %v2018, %v2114
        %v2116 = vpop.f32.mrb[0].mxu0
        %2117 = vmatprep.mubr.bf16.mxu0 0
        %2118 = vmatmul.mubr.bf16.gmra.mrb[0].mxu0 %v1703
        %v2119 = vpop.f32.mrb[0].mxu0
        %v2120 = vadd.f32 %v2023, %v2119
        %v2121 = vpop.f32.mrb[0].mxu0
        %v2122 = vpop.f32.mrb[0].mxu0
        %v2123 = vadd.f32 %v2026, %v2122
        %v2124 = vpop.f32.mrb[0].mxu0
        %2125 = vmatprep.mubr.bf16.mxu0 0
        %2126 = vmatmul.mubr.bf16.gmra.mrb[0].mxu0 %v1706
        %v2127 = vpop.f32.mrb[0].mxu0
        %v2128 = vadd.f32 %v2031, %v2127
        %v2129 = vpop.f32.mrb[0].mxu0
        %v2130 = vpop.f32.mrb[0].mxu0
        %v2131 = vadd.f32 %v2034, %v2130
        %v2132 = vpop.f32.mrb[0].mxu0
        %2133 = vmatprep.mubr.bf16.mxu0 0
        %2134 = vmatmul.mubr.bf16.gmra.mrb[0].mxu0 %v1709
        %v2135 = vpop.f32.mrb[0].mxu0
        %v2136 = vadd.f32 %v2039, %v2135
        %v2137 = vpop.f32.mrb[0].mxu0
        %v2138 = vpop.f32.mrb[0].mxu0
        %v2139 = vadd.f32 %v2042, %v2138
        %v2140 = vpop.f32.mrb[0].mxu0
        %2141 = vmatprep.mubr.bf16.mxu0 0
        %2142 = vmatmul.mubr.bf16.gmra.mrb[0].mxu0 %v1712
        %v2143 = vpop.f32.mrb[0].mxu0
        %v2144 = vadd.f32 %v2047, %v2143
        %v2145 = vpop.f32.mrb[0].mxu0
        %v2146 = vpop.f32.mrb[0].mxu0
        %v2147 = vadd.f32 %v2050, %v2146
        %v2148 = vpop.f32.mrb[0].mxu0
        %2149 = vmatprep.mubr.bf16.mxu0 0
        %2150 = vmatmul.mubr.bf16.gmra.mrb[0].mxu0 %v1715
        %v2151 = vpop.f32.mrb[0].mxu0
        %v2152 = vadd.f32 %v2055, %v2151
        %v2153 = vpop.f32.mrb[0].mxu0
        %v2154 = vpop.f32.mrb[0].mxu0
        %v2155 = vadd.f32 %v2058, %v2154
        %v2156 = vpop.f32.mrb[0].mxu0
        %2157 = vdwg.mxu0
        %v2158 = vld [vmem:[%s221 + $0x100] sm:$0xf]
        %v2159 = vld [vmem:[%s221 + $0x104] sm:$0xf]
        %v2160 = vld [vmem:[%s221 + $0x108] sm:$0xf]
        %v2161 = vld [vmem:[%s221 + $0x10c] sm:$0xf]
        %v2162 = vld [vmem:[%s221 + $0x110] sm:$0xf]
        %v2163 = vld [vmem:[%s221 + $0x114] sm:$0xf]
        %v2164 = vld [vmem:[%s221 + $0x118] sm:$0xf]
        %v2165 = vld [vmem:[%s221 + $0x11c] sm:$0xf]
        %v2166 = vld [vmem:[%s221 + $0x120] sm:$0xf]
        %v2167 = vld [vmem:[%s221 + $0x124] sm:$0xf]
        %v2168 = vld [vmem:[%s221 + $0x128] sm:$0xf]
        %v2169 = vld [vmem:[%s221 + $0x12c] sm:$0xf]
        %v2170 = vld [vmem:[%s221 + $0x130] sm:$0xf]
        %v2171 = vld [vmem:[%s221 + $0x134] sm:$0xf]
        %v2172 = vld [vmem:[%s221 + $0x138] sm:$0xf]
        %v2173 = vld [vmem:[%s221 + $0x13c] sm:$0xf]
        %v2190 = vunpack.c.l.b16 %v2158
        %v2191 = vunpack.c.l.b16 %v2159
        %v2192 = vunpack.c.l.b16 %v2160
        %v2193 = vunpack.c.l.b16 %v2161
        %v2194 = vunpack.c.l.b16 %v2162
        %v2195 = vunpack.c.l.b16 %v2163
        %v2196 = vunpack.c.l.b16 %v2164
        %v2197 = vunpack.c.l.b16 %v2165
        %v2198 = vunpack.c.l.b16 %v2166
        %v2199 = vunpack.c.l.b16 %v2167
        %v2200 = vunpack.c.l.b16 %v2168
        %v2201 = vunpack.c.l.b16 %v2169
        %v2202 = vunpack.c.l.b16 %v2170
        %v2203 = vunpack.c.l.b16 %v2171
        %v2204 = vunpack.c.l.b16 %v2172
        %v2205 = vunpack.c.l.b16 %v2173
        %v2206 = vpack.c.b16 %v2191, %v2190
        %v2207 = vpack.c.b16 %v2193, %v2192
        %v2208 = vpack.c.b16 %v2195, %v2194
        %v2209 = vpack.c.b16 %v2197, %v2196
        %v2210 = vpack.c.b16 %v2199, %v2198
        %v2211 = vpack.c.b16 %v2201, %v2200
        %v2212 = vpack.c.b16 %v2203, %v2202
        %v2213 = vpack.c.b16 %v2205, %v2204
        %v2215 = vsel %vm309, %v2206, 0
        %v2218 = vsel %vm309, %v2207, 0
        %v2221 = vsel %vm309, %v2208, 0
        %v2224 = vsel %vm309, %v2209, 0
        %v2227 = vsel %vm309, %v2210, 0
        %v2230 = vsel %vm309, %v2211, 0
        %v2233 = vsel %vm309, %v2212, 0
        %v2236 = vsel %vm309, %v2213, 0
        %2238 = vmatprep.subr.bf16.mxu0 0
        %2239 = vmatpush1.bf16.msra.mxu0 %v641
        %2240 = vmatprep.subr.bf16.mxu0 0
        %2241 = vmatpush1.bf16.msra.mxu0 %v642
        %2242 = vmatprep.subr.bf16.mxu0 0
        %2243 = vmatpush1.bf16.msra.mxu0 0
        %2244 = vmatprep.subr.bf16.mxu0 0
        %2245 = vmatpush1.bf16.msra.mxu0 0
        %2246 = vmatprep.subr.bf16.mxu0 0
        %2247 = vmatpush1.bf16.msra.mxu0 0
        %2248 = vmatprep.subr.bf16.mxu0 0
        %2249 = vmatpush1.bf16.msra.mxu0 0
        %2250 = vmatprep.subr.bf16.mxu0 0
        %2251 = vmatpush1.bf16.msra.mxu0 0
        %2252 = vmatprep.subr.bf16.mxu0 0
        %2253 = vmatpush1.bf16.msra.mxu0 0
        %2254 = vmatprep.subr.bf16.mxu0 0
        %2255 = vmatpush1.bf16.msra.mxu0 0
        %2256 = vmatprep.subr.bf16.mxu0 0
        %2257 = vmatpush1.bf16.msra.mxu0 0
        %2258 = vmatprep.subr.bf16.mxu0 0
        %2259 = vmatpush1.bf16.msra.mxu0 0
        %2260 = vmatprep.subr.bf16.mxu0 0
        %2261 = vmatpush1.bf16.msra.mxu0 0
        %2262 = vmatprep.subr.bf16.mxu0 0
        %2263 = vmatpush1.bf16.msra.mxu0 0
        %2264 = vmatprep.subr.bf16.mxu0 0
        %2265 = vmatpush1.bf16.msra.mxu0 0
        %2266 = vmatprep.subr.bf16.mxu0 0
        %2267 = vmatpush1.bf16.msra.mxu0 0
        %2268 = vmatprep.subr.bf16.mxu0 0
        %2269 = vmatpush1.bf16.msra.mxu0 0
        %2270 = vmatprep.mubr.bf16.mxu0 0
        %2271 = vmatmul.mubr.bf16.gmra.mrb[0].mxu0 %v2215
        %v2272 = vpop.f32.mrb[0].mxu0
        %v2273 = vadd.f32 0.0, %v2272
        %v2274 = vpop.f32.mrb[0].mxu0
        %v2275 = vpop.f32.mrb[0].mxu0
        %v2276 = vadd.f32 0.0, %v2275
        %v2277 = vpop.f32.mrb[0].mxu0
        %2278 = vmatprep.mubr.bf16.mxu0 0
        %2279 = vmatmul.mubr.bf16.gmra.mrb[0].mxu0 %v2218
        %v2280 = vpop.f32.mrb[0].mxu0
        %v2281 = vadd.f32 0.0, %v2280
        %v2282 = vpop.f32.mrb[0].mxu0
        %v2283 = vpop.f32.mrb[0].mxu0
        %v2284 = vadd.f32 0.0, %v2283
        %v2285 = vpop.f32.mrb[0].mxu0
        %2286 = vmatprep.mubr.bf16.mxu0 0
        %2287 = vmatmul.mubr.bf16.gmra.mrb[0].mxu0 %v2221
        %v2288 = vpop.f32.mrb[0].mxu0
        %v2289 = vadd.f32 0.0, %v2288
        %v2290 = vpop.f32.mrb[0].mxu0
        %v2291 = vpop.f32.mrb[0].mxu0
        %v2292 = vadd.f32 0.0, %v2291
        %v2293 = vpop.f32.mrb[0].mxu0
        %2294 = vmatprep.mubr.bf16.mxu0 0
        %2295 = vmatmul.mubr.bf16.gmra.mrb[0].mxu0 %v2224
        %v2296 = vpop.f32.mrb[0].mxu0
        %v2297 = vadd.f32 0.0, %v2296
        %v2298 = vpop.f32.mrb[0].mxu0
        %v2299 = vpop.f32.mrb[0].mxu0
        %v2300 = vadd.f32 0.0, %v2299
        %v2301 = vpop.f32.mrb[0].mxu0
        %2302 = vmatprep.mubr.bf16.mxu0 0
        %2303 = vmatmul.mubr.bf16.gmra.mrb[0].mxu0 %v2227
        %v2304 = vpop.f32.mrb[0].mxu0
        %v2305 = vadd.f32 0.0, %v2304
        %v2306 = vpop.f32.mrb[0].mxu0
        %v2307 = vpop.f32.mrb[0].mxu0
        %v2308 = vadd.f32 0.0, %v2307
        %v2309 = vpop.f32.mrb[0].mxu0
        %2310 = vmatprep.mubr.bf16.mxu0 0
        %2311 = vmatmul.mubr.bf16.gmra.mrb[0].mxu0 %v2230
        %v2312 = vpop.f32.mrb[0].mxu0
        %v2313 = vadd.f32 0.0, %v2312
        %v2314 = vpop.f32.mrb[0].mxu0
        %v2315 = vpop.f32.mrb[0].mxu0
        %v2316 = vadd.f32 0.0, %v2315
        %v2317 = vpop.f32.mrb[0].mxu0
        %2318 = vmatprep.mubr.bf16.mxu0 0
        %2319 = vmatmul.mubr.bf16.gmra.mrb[0].mxu0 %v2233
        %v2320 = vpop.f32.mrb[0].mxu0
        %v2321 = vadd.f32 0.0, %v2320
        %v2322 = vpop.f32.mrb[0].mxu0
        %v2323 = vpop.f32.mrb[0].mxu0
        %v2324 = vadd.f32 0.0, %v2323
        %v2325 = vpop.f32.mrb[0].mxu0
        %2326 = vmatprep.mubr.bf16.mxu0 0
        %2327 = vmatmul.mubr.bf16.gmra.mrb[0].mxu0 %v2236
        %v2328 = vpop.f32.mrb[0].mxu0
        %v2329 = vadd.f32 0.0, %v2328
        %v2330 = vpop.f32.mrb[0].mxu0
        %v2331 = vpop.f32.mrb[0].mxu0
        %v2332 = vadd.f32 0.0, %v2331
        %v2333 = vpop.f32.mrb[0].mxu0
        %2334 = vdwg.mxu0
        %v2335 = vadd.f32 %v2096, %v2273
        %v2336 = vadd.f32 %v2099, %v2276
        %v2337 = vadd.f32 %v2104, %v2281
        %v2338 = vadd.f32 %v2107, %v2284
        %v2339 = vadd.f32 %v2112, %v2289
        %v2340 = vadd.f32 %v2115, %v2292
        %v2341 = vadd.f32 %v2120, %v2297
        %v2342 = vadd.f32 %v2123, %v2300
        %v2343 = vadd.f32 %v2128, %v2305
        %v2344 = vadd.f32 %v2131, %v2308
        %v2345 = vadd.f32 %v2136, %v2313
        %v2346 = vadd.f32 %v2139, %v2316
        %v2347 = vadd.f32 %v2144, %v2321
        %v2348 = vadd.f32 %v2147, %v2324
        %v2349 = vadd.f32 %v2152, %v2329
        %v2350 = vadd.f32 %v2155, %v2332
        %v2351 = vadd.f32 %v2335, %v786
        %v2352 = vadd.f32 %v2336, %v786
        %v2353 = vadd.f32 %v2337, %v786
        %v2354 = vadd.f32 %v2338, %v786
        %v2355 = vadd.f32 %v2339, %v786
        %v2356 = vadd.f32 %v2340, %v786
        %v2357 = vadd.f32 %v2341, %v786
        %v2358 = vadd.f32 %v2342, %v786
        %v2359 = vadd.f32 %v2343, %v786
        %v2360 = vadd.f32 %v2344, %v786
        %v2361 = vadd.f32 %v2345, %v786
        %v2362 = vadd.f32 %v2346, %v786
        %v2363 = vadd.f32 %v2347, %v786
        %v2364 = vadd.f32 %v2348, %v786
        %v2365 = vadd.f32 %v2349, %v786
        %v2366 = vadd.f32 %v2350, %v786
        %v2367 = vmax.f32 %v2351, 0.0
        %v2368 = vmax.f32 %v2352, 0.0
        %v2369 = vmax.f32 %v2353, 0.0
        %v2370 = vmax.f32 %v2354, 0.0
        %v2371 = vmax.f32 %v2355, 0.0
        %v2372 = vmax.f32 %v2356, 0.0
        %v2373 = vmax.f32 %v2357, 0.0
        %v2374 = vmax.f32 %v2358, 0.0
        %v2375 = vmax.f32 %v2359, 0.0
        %v2376 = vmax.f32 %v2360, 0.0
        %v2377 = vmax.f32 %v2361, 0.0
        %v2378 = vmax.f32 %v2362, 0.0
        %v2379 = vmax.f32 %v2363, 0.0
        %v2380 = vmax.f32 %v2364, 0.0
        %v2381 = vmax.f32 %v2365, 0.0
        %v2382 = vmax.f32 %v2366, 0.0
        %v2383 = vadd.f32 %v2367, %v2368
        %v2384 = vadd.f32 %v2383, %v2369
        %v2385 = vadd.f32 %v2384, %v2370
        %v2386 = vadd.f32 %v2385, %v2371
        %v2387 = vadd.f32 %v2386, %v2372
        %v2388 = vadd.f32 %v2387, %v2373
        %v2389 = vadd.f32 %v2388, %v2374
        %v2390 = vadd.f32 %v2389, %v2375
        %v2391 = vadd.f32 %v2390, %v2376
        %v2392 = vadd.f32 %v2391, %v2377
        %v2393 = vadd.f32 %v2392, %v2378
        %v2394 = vadd.f32 %v2393, %v2379
        %v2395 = vadd.f32 %v2394, %v2380
        %v2396 = vadd.f32 %v2395, %v2381
        %v2397 = vadd.f32 %v2396, %v2382
        %v2398 = vrot.slane %v2397, 4
        %v2399 = vadd.f32 %v2397, %v2398
        %v2400 = vrot.slane %v2399, 2
        %v2401 = vadd.f32 %v2399, %v2400
        %v2402 = vrot.slane %v2401, 1
        %v2403 = vadd.f32 %v2401, %v2402
        %v2404 = vadd.f32 %v1883, %v2403
        %v2405 = vld [vmem:[%s3] sm:$0xff]
        %v2406 = vld [vmem:[%s3 + $0x8] sm:$0xff]
        %v2407 = vld [vmem:[%s3 + $0x10] sm:$0xff]
        %v2408 = vld [vmem:[%s3 + $0x18] sm:$0xff]
        %v2409 = vld [vmem:[%s3 + $0x20] sm:$0xff]
        %v2410 = vld [vmem:[%s3 + $0x28] sm:$0xff]
        %v2411 = vld [vmem:[%s3 + $0x30] sm:$0xff]
        %v2412 = vld [vmem:[%s3 + $0x38] sm:$0xff]
        %v2413 = vld [vmem:[%s3 + $0x40] sm:$0xff]
        %v2414 = vld [vmem:[%s3 + $0x48] sm:$0xff]
        %v2415 = vld [vmem:[%s3 + $0x50] sm:$0xff]
        %v2416 = vld [vmem:[%s3 + $0x58] sm:$0xff]
        %v2417 = vld [vmem:[%s3 + $0x60] sm:$0xff]
        %v2418 = vld [vmem:[%s3 + $0x68] sm:$0xff]
        %v2419 = vld [vmem:[%s3 + $0x70] sm:$0xff]
        %v2420 = vld [vmem:[%s3 + $0x78] sm:$0xff]
        %v2421 = vld [vmem:[%s4] sm:$0x1]
        %2422 = vmatprep.subr.mxu0 0.0
        %2423 = vmatpush1.msra.mxu0 %v2405
        %2424 = vmatprep.subr.mxu0 0.0
        %2425 = vmatpush1.msra.mxu0 %v2406
        %2426 = vmatprep.subr.mxu0 0.0
        %2427 = vmatpush1.msra.mxu0 %v2407
        %2428 = vmatprep.subr.mxu0 0.0
        %2429 = vmatpush1.msra.mxu0 %v2408
        %2430 = vmatprep.subr.mxu0 0.0
        %2431 = vmatpush1.msra.mxu0 %v2409
        %2432 = vmatprep.subr.mxu0 0.0
        %2433 = vmatpush1.msra.mxu0 %v2410
        %2434 = vmatprep.subr.mxu0 0.0
        %2435 = vmatpush1.msra.mxu0 %v2411
        %2436 = vmatprep.subr.mxu0 0.0
        %2437 = vmatpush1.msra.mxu0 %v2412
        %2438 = vmatprep.subr.mxu0 0.0
        %2439 = vmatpush1.msra.mxu0 %v2413
        %2440 = vmatprep.subr.mxu0 0.0
        %2441 = vmatpush1.msra.mxu0 %v2414
        %2442 = vmatprep.subr.mxu0 0.0
        %2443 = vmatpush1.msra.mxu0 %v2415
        %2444 = vmatprep.subr.mxu0 0.0
        %2445 = vmatpush1.msra.mxu0 %v2416
        %2446 = vmatprep.subr.mxu0 0.0
        %2447 = vmatpush1.msra.mxu0 %v2417
        %2448 = vmatprep.subr.mxu0 0.0
        %2449 = vmatpush1.msra.mxu0 %v2418
        %2450 = vmatprep.subr.mxu0 0.0
        %2451 = vmatpush1.msra.mxu0 %v2419
        %2452 = vmatprep.subr.mxu0 0.0
        %2453 = vmatpush1.msra.mxu0 %v2420
        %2454 = vmatprep.subr.mxu0 0.0
        %2455 = vmatpush1.msra.mxu0 0.0
        %2456 = vmatprep.subr.mxu0 0.0
        %2457 = vmatpush1.msra.mxu0 0.0
        %2458 = vmatprep.subr.mxu0 0.0
        %2459 = vmatpush1.msra.mxu0 0.0
        %2460 = vmatprep.subr.mxu0 0.0
        %2461 = vmatpush1.msra.mxu0 0.0
        %2462 = vmatprep.subr.mxu0 0.0
        %2463 = vmatpush1.msra.mxu0 0.0
        %2464 = vmatprep.subr.mxu0 0.0
        %2465 = vmatpush1.msra.mxu0 0.0
        %2466 = vmatprep.subr.mxu0 0.0
        %2467 = vmatpush1.msra.mxu0 0.0
        %2468 = vmatprep.subr.mxu0 0.0
        %2469 = vmatpush1.msra.mxu0 0.0
        %2470 = vmatprep.subr.mxu0 0.0
        %2471 = vmatpush1.msra.mxu0 0.0
        %2472 = vmatprep.subr.mxu0 0.0
        %2473 = vmatpush1.msra.mxu0 0.0
        %2474 = vmatprep.subr.mxu0 0.0
        %2475 = vmatpush1.msra.mxu0 0.0
        %2476 = vmatprep.subr.mxu0 0.0
        %2477 = vmatpush1.msra.mxu0 0.0
        %2478 = vmatprep.subr.mxu0 0.0
        %2479 = vmatpush1.msra.mxu0 0.0
        %2480 = vmatprep.subr.mxu0 0.0
        %2481 = vmatpush1.msra.mxu0 0.0
        %2482 = vmatprep.subr.mxu0 0.0
        %2483 = vmatpush1.msra.mxu0 0.0
        %2484 = vmatprep.subr.mxu0 0.0
        %2485 = vmatpush1.msra.mxu0 0.0
        %2486 = vmatprep.mubr.f32.mxu0 0.0
        %2487 = vmatmul.mubr.f32.gmra.mrb[0].mxu0 %v2404
        %v2488 = vpop.f32.mrb[0].mxu0
        %v2489 = vadd.f32 %v2421, %v2488
        %v2490 = vpop.f32.mrb[0].mxu0
        %2491 = vdwg.mxu0
        %2492 = vst [vmem:[%s216] sm:$0x1] %v2489
        %s2493 = sand.u32 %s137, 1
        %s2494 = scalar_lea.sflag [#allocation3], %s2493
        %s2495 = sand.u32 %s137, 1
        %s2496 = scalar_lea.vmem [#allocation2], %s2495
        // Predicated region
        $region41: #{encoder_decoder_forward.1} parent=39 // pred_check
          %p2497 = pneg %p147
        $region42: #{encoder_decoder_forward.1} parent=39 // pred_check_branch
          %2499 = sbr.rel (%p2497) target = $region44
        $region43: #{encoder_decoder_forward.1} parent=39 // pred_region
          %s2501 = ssub.s32 16, 16
          %2502 = vsyncadd %s2494, %s2501
          %s2503 = smul.addr %s19, 16
          %s2504 = scalar_lea.hbm %s5, %s2503
          %s2506 = sshll.u32 %s2496, 4
          %s2507 = int_to_ptr.vmem [resolvable:$true] %s2506
          %2509 = dma.vmem_to_hbm [thread:$0]  %s2507, 16, %s2504, %s2494
        $region44: #{encoder_decoder_forward.1} parent=39 // pred_fallthru
          _
      $region40: #{encoder_decoder_forward.1} parent=5 // pred_fallthru
        _
      %p2510 = scmp.le.s32.totalorder 2, %s14
      // Predicated region
      $region45: #{encoder_decoder_forward.1} parent=5 // pred_check
        %p2511 = pneg %p2510
      $region46: #{encoder_decoder_forward.1} parent=5 // pred_check_branch
        %2513 = sbr.rel (%p2511) target = $region48
      $region47: #{encoder_decoder_forward.1} parent=5 // pred_region
        %s2514 = ssub.s32 %s14, 2
        // Predicated region
        $region49: #{encoder_decoder_forward.1} parent=47 // pred_check
          %p2515 = pneg %p153
        $region50: #{encoder_decoder_forward.1} parent=47 // pred_check_branch
          %2517 = sbr.rel (%p2515) target = $region52
        $region51: #{encoder_decoder_forward.1} parent=47 // pred_region
          %s2518 = sand.u32 %s138, 1
          %s2519 = scalar_lea.sflag [#allocation3], %s2518
          %s2520 = sand.u32 %s138, 1
          %s2521 = scalar_lea.vmem [#allocation2], %s2520
          %2522 = dma.done %s2519, 16
        $region52: #{encoder_decoder_forward.1} parent=47 // pred_fallthru
          _
      $region48: #{encoder_decoder_forward.1} parent=5 // pred_fallthru
        _
    $region6: #{encoder_decoder_forward.1} parent=1 // loop_footer
      %s18 = sadd.s32 1, %s14
    $region7: #{encoder_decoder_forward.1} parent=1 // loop_footer_branch
      %13 = sbr.rel target = $region3
    $region8: #{encoder_decoder_forward.1} parent=1 // loop_exit
      _
    %2523 = vsyncpa [#allocation3], 1
    %s2524 = scalar_lea.sflag [#allocation3], 1
    %2525 = vsyncpa %s2524, 1

</llo_original>
